<compile_context>
chip_gen: v6e
topology: v6e:2x2x1
jax: 0.10.0
libtpu: 0.0.40
codegen_flags: <defaults>
</compile_context>

<pallas_src>
import functools

import jax
import jax.numpy as jnp
from jax.experimental import pallas as pl
from jax.experimental.pallas import tpu as pltpu


def _spatial_attention_kernel(x_ref, w_ref, o_ref, sum_ref, max_ref, pad_ref,
                              *, K, C, H, W):
    """One (batch, channel-chunk) grid step.

    x_ref   : (1, c_blk, H, W)        VMEM (native dtype)
    w_ref   : (2*K*K,) f32            SMEM (whole conv weight)
    o_ref   : (1, H, W)               VMEM (same block across chunk axis)
    sum_ref : (H, W) f32              VMEM running channel sum
    max_ref : (H, W) f32              VMEM running channel max
    pad_ref : (2, H+K-1, W+K-1) f32   VMEM zero-padded conv input
    """
    c_idx = pl.program_id(1)
    n_chunks = pl.num_programs(1)
    pad = K // 2
    wp = W + 2 * pad

    x = x_ref[0].astype(jnp.float32)              # (c_blk, H, W)
    part_sum = jnp.sum(x, axis=0)                 # (H, W)
    part_max = jnp.max(x, axis=0)                 # (H, W)

    @pl.when(c_idx == 0)
    def _init():
        sum_ref[...] = jnp.zeros_like(sum_ref)
        max_ref[...] = jnp.full_like(max_ref, -jnp.inf)

    sum_ref[...] = sum_ref[...] + part_sum
    max_ref[...] = jnp.maximum(max_ref[...], part_max)

    @pl.when(c_idx == n_chunks - 1)
    def _finalize():
        # Zero only the K-1 halo border strips of the padded scratch; the
        # interior is fully overwritten right below.  (Scratch is
        # uninitialized, and a "first grid step only" init would be unsafe
        # under megacore-parallel grid sharding.)
        for c in range(2):
            pad_ref[c, 0:pad, :] = jnp.zeros((pad, wp), jnp.float32)
            pad_ref[c, pad + H:2 * pad + H, :] = jnp.zeros((pad, wp),
                                                           jnp.float32)
            pad_ref[c, pad:pad + H, 0:pad] = jnp.zeros((H, pad), jnp.float32)
            pad_ref[c, pad:pad + H, pad + W:2 * pad + W] = jnp.zeros(
                (H, pad), jnp.float32)

        pad_ref[0, pad:pad + H, pad:pad + W] = sum_ref[...] * (1.0 / C)
        pad_ref[1, pad:pad + H, pad:pad + W] = max_ref[...]

        # Dense KxK conv (2 in-channels -> 1 out-channel) as an unrolled
        # shift-multiply-accumulate.  The padded slab is loaded once per
        # channel; the lane-direction slice (kj) is hoisted out of the ki
        # loop, so only 2*K lane slices are materialized.
        acc = jnp.zeros((H, W), jnp.float32)
        for c in range(2):
            p = pad_ref[c]                        # (H+K-1, W+K-1), one load
            for kj in range(K):
                col = p[:, kj:kj + W]             # (H+K-1, W) lane slice
                for ki in range(K):
                    w = w_ref[c * K * K + ki * K + kj]   # SMEM scalar read
                    acc = acc + w * col[ki:ki + H, :]

        o_ref[0] = jax.nn.sigmoid(acc).astype(o_ref.dtype)


def spatial_attention(x, weight, *, kernel_size=7):
    """x: (B, C, H, W); weight: (1, 2, K, K). Returns (B, 1, H, W)."""
    assert kernel_size in (3, 7), "kernel size must be 3 or 7"
    B, C, H, W = x.shape
    K = kernel_size
    assert weight.shape == (1, 2, K, K)

    # Channel chunk: largest divisor of C whose (c_blk, H, W) block stays
    # <= ~2 MiB, so the double-buffered input block fits comfortably in
    # every generation's scoped VMEM (incl. v7x).
    itemsize = jnp.dtype(x.dtype).itemsize
    max_c = max(1, (2 * 1024 * 1024) // max(1, H * W * itemsize))
    c_blk = min(C, max_c)
    while C % c_blk != 0:
        c_blk -= 1
    n_chunks = C // c_blk

    # Flattened f32 conv weight -> SMEM (scalar reads inside the kernel).
    w_flat = weight.astype(jnp.float32).reshape(2 * K * K)

    kernel = functools.partial(_spatial_attention_kernel, K=K, C=C, H=H, W=W)

    # Explicit VMEM budget (double-buffered input block + output + scratch)
    # with generous headroom, capped well under v7x's physical VMEM.
    pad_elems = 2 * (H + K - 1) * (W + K - 1)
    est = (2 * c_blk * H * W * itemsize          # double-buffered input
           + 2 * H * W * itemsize                # output block
           + (2 * H * W + pad_elems) * 4)        # f32 scratch
    vmem_limit = int(min(32 * 1024 * 1024, max(16 * 1024 * 1024, 8 * est)))

    out = pl.pallas_call(
        kernel,
        out_shape=jax.ShapeDtypeStruct((B, H, W), x.dtype),
        grid_spec=pltpu.PrefetchScalarGridSpec(
            num_scalar_prefetch=0,
            grid=(B, n_chunks),
            in_specs=[
                pl.BlockSpec((1, c_blk, H, W), lambda b, c: (b, c, 0, 0)),
                pl.BlockSpec(memory_space=pltpu.MemorySpace.SMEM),
            ],
            out_specs=pl.BlockSpec((1, H, W), lambda b, c: (b, 0, 0)),
            scratch_shapes=[
                pltpu.VMEM((H, W), jnp.float32),                      # sum
                pltpu.VMEM((H, W), jnp.float32),                      # max
                pltpu.VMEM((2, H + K - 1, W + K - 1), jnp.float32),   # pad
            ],
        ),
        compiler_params=pltpu.CompilerParams(
            dimension_semantics=("parallel", "arbitrary"),
            vmem_limit_bytes=vmem_limit),
    )(x, w_flat)
    return out.reshape(B, 1, H, W)


def _reference(x, weight):
    """Pure-JAX reference of the PyTorch forward (NCHW)."""
    avg_out = jnp.mean(x, axis=1, keepdims=True)
    max_out = jnp.max(x, axis=1, keepdims=True)
    feat = jnp.concatenate([avg_out, max_out], axis=1)       # (B, 2, H, W)
    pad = weight.shape[-1] // 2
    y = jax.lax.conv_general_dilated(
        feat.astype(jnp.float32), weight.astype(jnp.float32),
        window_strides=(1, 1), padding=[(pad, pad), (pad, pad)],
        dimension_numbers=("NCHW", "OIHW", "NCHW"))
    return jax.nn.sigmoid(y).astype(x.dtype)


if __name__ == "__main__":
    B, C, H, W = 2, 4, 16, 16
    K = 7

    key = jax.random.PRNGKey(0)
    kx, kw = jax.random.split(key)
    x = jax.random.normal(kx, (B, C, H, W), dtype=jnp.float32)
    # Deterministic synthetic conv weight (Conv2d(2, 1, 7, bias=False)).
    weight = (jax.random.normal(kw, (1, 2, K, K), dtype=jnp.float32)
              * (1.0 / (2 * K * K)) ** 0.5)

    out = spatial_attention(x, weight, kernel_size=K)
    out = jax.block_until_ready(out)

    ref = _reference(x, weight)
    assert out.shape == (B, 1, H, W), out.shape
    assert jnp.allclose(out, ref, atol=1e-5, rtol=1e-5), (
        float(jnp.max(jnp.abs(out - ref))))

    print("KERNEL_OK")
</pallas_src>

<mosaic_0001>
module attributes {stable_mosaic.version = 11 : i64} {
  func.func @_spatial_attention_kernel(%arg0: i32, %arg1: i32, %arg2: memref<1x4x16x16xf32, #tpu.memory_space<vmem>>, %arg3: memref<98xf32, #tpu.memory_space<smem>>, %arg4: memref<1x16x16xf32, #tpu.memory_space<vmem>>, %arg5: memref<16x16xf32, #tpu.memory_space<vmem>>, %arg6: memref<16x16xf32, #tpu.memory_space<vmem>>, %arg7: memref<2x22x22xf32, #tpu.memory_space<vmem>>) attributes {dimension_semantics = [#tpu.dimension_semantics<parallel>, #tpu.dimension_semantics<arbitrary>], iteration_bounds = array<i64: 2, 1>, scalar_prefetch = 0 : i64, scratch_operands = 3 : i64, tpu.core_type = #tpu.core_type<tc>, window_params = [{transform_indices = @transform_0, window_bounds = array<i64: 1, 4, 16, 16>}, {transform_indices = @transform_1, window_bounds = array<i64: 98>}, {transform_indices = @transform_2, window_bounds = array<i64: 1, 16, 16>}]} {
    %c0 = arith.constant 0 : index
    %c0_0 = arith.constant 0 : index
    %c0_1 = arith.constant 0 : index
    %c0_2 = arith.constant 0 : index
    %0 = vector.load %arg2[%c0, %c0_0, %c0_1, %c0_2] : memref<1x4x16x16xf32, #tpu.memory_space<vmem>>, vector<1x4x16x16xf32>
    %1 = vector.shape_cast %0 : vector<1x4x16x16xf32> to vector<4x16x16xf32>
    %cst = arith.constant dense<0.000000e+00> : vector<16x16xf32>
    %2 = vector.multi_reduction <add>, %1, %cst [0] : vector<4x16x16xf32> to vector<16x16xf32>
    %cst_3 = arith.constant dense<0xFF800000> : vector<16x16xf32>
    %3 = vector.multi_reduction <maximumf>, %1, %cst_3 [0] : vector<4x16x16xf32> to vector<16x16xf32>
    %c0_i32 = arith.constant 0 : i32
    %4 = arith.cmpi eq, %arg1, %c0_i32 : i32
    %5 = arith.extui %4 : i1 to i32
    %c0_i32_4 = arith.constant 0 : i32
    %6 = arith.cmpi ne, %5, %c0_i32_4 : i32
    scf.if %6 {
      %cst_15 = arith.constant 0.000000e+00 : f32
      %16 = vector.broadcast %cst_15 : f32 to vector<16x16xf32>
      %c0_16 = arith.constant 0 : index
      %c0_17 = arith.constant 0 : index
      %17 = vector.load %arg5[%c0_16, %c0_17] : memref<16x16xf32, #tpu.memory_space<vmem>>, vector<16x16xf32>
      tpu.vector_store %arg5[%c0_16, %c0_17], %16 {strides = array<i32>} : memref<16x16xf32, #tpu.memory_space<vmem>>, vector<16x16xf32>,
      %cst_18 = arith.constant 0xFF800000 : f32
      %18 = vector.broadcast %cst_18 : f32 to vector<16x16xf32>
      %c0_19 = arith.constant 0 : index
      %c0_20 = arith.constant 0 : index
      %19 = vector.load %arg6[%c0_19, %c0_20] : memref<16x16xf32, #tpu.memory_space<vmem>>, vector<16x16xf32>
      tpu.vector_store %arg6[%c0_19, %c0_20], %18 {strides = array<i32>} : memref<16x16xf32, #tpu.memory_space<vmem>>, vector<16x16xf32>,
    } else {
    }
    %c0_5 = arith.constant 0 : index
    %c0_6 = arith.constant 0 : index
    %7 = vector.load %arg5[%c0_5, %c0_6] : memref<16x16xf32, #tpu.memory_space<vmem>>, vector<16x16xf32>
    %8 = arith.addf %7, %2 : vector<16x16xf32>
    %c0_7 = arith.constant 0 : index
    %c0_8 = arith.constant 0 : index
    %9 = vector.load %arg5[%c0_7, %c0_8] : memref<16x16xf32, #tpu.memory_space<vmem>>, vector<16x16xf32>
    tpu.vector_store %arg5[%c0_7, %c0_8], %8 {strides = array<i32>} : memref<16x16xf32, #tpu.memory_space<vmem>>, vector<16x16xf32>,
    %c0_9 = arith.constant 0 : index
    %c0_10 = arith.constant 0 : index
    %10 = vector.load %arg6[%c0_9, %c0_10] : memref<16x16xf32, #tpu.memory_space<vmem>>, vector<16x16xf32>
    %11 = arith.maximumf %10, %3 : vector<16x16xf32>
    %c0_11 = arith.constant 0 : index
    %c0_12 = arith.constant 0 : index
    %12 = vector.load %arg6[%c0_11, %c0_12] : memref<16x16xf32, #tpu.memory_space<vmem>>, vector<16x16xf32>
    tpu.vector_store %arg6[%c0_11, %c0_12], %11 {strides = array<i32>} : memref<16x16xf32, #tpu.memory_space<vmem>>, vector<16x16xf32>,
    %c0_i32_13 = arith.constant 0 : i32
    %13 = arith.cmpi eq, %arg1, %c0_i32_13 : i32
    %14 = arith.extui %13 : i1 to i32
    %c0_i32_14 = arith.constant 0 : i32
    %15 = arith.cmpi ne, %14, %c0_i32_14 : i32
    scf.if %15 {
      %cst_15 = arith.constant 0.000000e+00 : f32
      %16 = vector.broadcast %cst_15 : f32 to vector<3x22xf32>
      %c0_16 = arith.constant 0 : index
      %c0_17 = arith.constant 0 : index
      %c0_18 = arith.constant 0 : index
      %17 = vector.load %arg7[%c0_16, %c0_17, %c0_18] : memref<2x22x22xf32, #tpu.memory_space<vmem>>, vector<1x3x22xf32>
      %18 = vector.shape_cast %17 : vector<1x3x22xf32> to vector<3x22xf32>
      %19 = vector.shape_cast %16 : vector<3x22xf32> to vector<1x3x22xf32>
      tpu.vector_store %arg7[%c0_16, %c0_17, %c0_18], %19 {strides = array<i32>} : memref<2x22x22xf32, #tpu.memory_space<vmem>>, vector<1x3x22xf32>,
      %cst_19 = arith.constant 0.000000e+00 : f32
      %20 = vector.broadcast %cst_19 : f32 to vector<3x22xf32>
      %c0_20 = arith.constant 0 : index
      %c19 = arith.constant 19 : index
      %c0_21 = arith.constant 0 : index
      %21 = vector.load %arg7[%c0_20, %c19, %c0_21] : memref<2x22x22xf32, #tpu.memory_space<vmem>>, vector<1x3x22xf32>
      %22 = vector.shape_cast %21 : vector<1x3x22xf32> to vector<3x22xf32>
      %23 = vector.shape_cast %20 : vector<3x22xf32> to vector<1x3x22xf32>
      tpu.vector_store %arg7[%c0_20, %c19, %c0_21], %23 {strides = array<i32>} : memref<2x22x22xf32, #tpu.memory_space<vmem>>, vector<1x3x22xf32>,
      %cst_22 = arith.constant 0.000000e+00 : f32
      %24 = vector.broadcast %cst_22 : f32 to vector<16x3xf32>
      %c0_23 = arith.constant 0 : index
      %c3 = arith.constant 3 : index
      %c0_24 = arith.constant 0 : index
      %25 = vector.load %arg7[%c0_23, %c3, %c0_24] : memref<2x22x22xf32, #tpu.memory_space<vmem>>, vector<1x16x3xf32>
      %26 = vector.shape_cast %25 : vector<1x16x3xf32> to vector<16x3xf32>
      %27 = vector.shape_cast %24 : vector<16x3xf32> to vector<1x16x3xf32>
      tpu.vector_store %arg7[%c0_23, %c3, %c0_24], %27 {strides = array<i32>} : memref<2x22x22xf32, #tpu.memory_space<vmem>>, vector<1x16x3xf32>,
      %cst_25 = arith.constant 0.000000e+00 : f32
      %28 = vector.broadcast %cst_25 : f32 to vector<16x3xf32>
      %c0_26 = arith.constant 0 : index
      %c3_27 = arith.constant 3 : index
      %c19_28 = arith.constant 19 : index
      %29 = vector.load %arg7[%c0_26, %c3_27, %c19_28] : memref<2x22x22xf32, #tpu.memory_space<vmem>>, vector<1x16x3xf32>
      %30 = vector.shape_cast %29 : vector<1x16x3xf32> to vector<16x3xf32>
      %31 = vector.shape_cast %28 : vector<16x3xf32> to vector<1x16x3xf32>
      tpu.vector_store %arg7[%c0_26, %c3_27, %c19_28], %31 {strides = array<i32>} : memref<2x22x22xf32, #tpu.memory_space<vmem>>, vector<1x16x3xf32>,
      %cst_29 = arith.constant 0.000000e+00 : f32
      %32 = vector.broadcast %cst_29 : f32 to vector<3x22xf32>
      %c1 = arith.constant 1 : index
      %c0_30 = arith.constant 0 : index
      %c0_31 = arith.constant 0 : index
      %33 = vector.load %arg7[%c1, %c0_30, %c0_31] : memref<2x22x22xf32, #tpu.memory_space<vmem>>, vector<1x3x22xf32>
      %34 = vector.shape_cast %33 : vector<1x3x22xf32> to vector<3x22xf32>
      %35 = vector.shape_cast %32 : vector<3x22xf32> to vector<1x3x22xf32>
      tpu.vector_store %arg7[%c1, %c0_30, %c0_31], %35 {strides = array<i32>} : memref<2x22x22xf32, #tpu.memory_space<vmem>>, vector<1x3x22xf32>,
      %cst_32 = arith.constant 0.000000e+00 : f32
      %36 = vector.broadcast %cst_32 : f32 to vector<3x22xf32>
      %c1_33 = arith.constant 1 : index
      %c19_34 = arith.constant 19 : index
      %c0_35 = arith.constant 0 : index
      %37 = vector.load %arg7[%c1_33, %c19_34, %c0_35] : memref<2x22x22xf32, #tpu.memory_space<vmem>>, vector<1x3x22xf32>
      %38 = vector.shape_cast %37 : vector<1x3x22xf32> to vector<3x22xf32>
      %39 = vector.shape_cast %36 : vector<3x22xf32> to vector<1x3x22xf32>
      tpu.vector_store %arg7[%c1_33, %c19_34, %c0_35], %39 {strides = array<i32>} : memref<2x22x22xf32, #tpu.memory_space<vmem>>, vector<1x3x22xf32>,
      %cst_36 = arith.constant 0.000000e+00 : f32
      %40 = vector.broadcast %cst_36 : f32 to vector<16x3xf32>
      %c1_37 = arith.constant 1 : index
      %c3_38 = arith.constant 3 : index
      %c0_39 = arith.constant 0 : index
      %41 = vector.load %arg7[%c1_37, %c3_38, %c0_39] : memref<2x22x22xf32, #tpu.memory_space<vmem>>, vector<1x16x3xf32>
      %42 = vector.shape_cast %41 : vector<1x16x3xf32> to vector<16x3xf32>
      %43 = vector.shape_cast %40 : vector<16x3xf32> to vector<1x16x3xf32>
      tpu.vector_store %arg7[%c1_37, %c3_38, %c0_39], %43 {strides = array<i32>} : memref<2x22x22xf32, #tpu.memory_space<vmem>>, vector<1x16x3xf32>,
      %cst_40 = arith.constant 0.000000e+00 : f32
      %44 = vector.broadcast %cst_40 : f32 to vector<16x3xf32>
      %c1_41 = arith.constant 1 : index
      %c3_42 = arith.constant 3 : index
      %c19_43 = arith.constant 19 : index
      %45 = vector.load %arg7[%c1_41, %c3_42, %c19_43] : memref<2x22x22xf32, #tpu.memory_space<vmem>>, vector<1x16x3xf32>
      %46 = vector.shape_cast %45 : vector<1x16x3xf32> to vector<16x3xf32>
      %47 = vector.shape_cast %44 : vector<16x3xf32> to vector<1x16x3xf32>
      tpu.vector_store %arg7[%c1_41, %c3_42, %c19_43], %47 {strides = array<i32>} : memref<2x22x22xf32, #tpu.memory_space<vmem>>, vector<1x16x3xf32>,
      %c0_44 = arith.constant 0 : index
      %c0_45 = arith.constant 0 : index
      %48 = vector.load %arg5[%c0_44, %c0_45] : memref<16x16xf32, #tpu.memory_space<vmem>>, vector<16x16xf32>
      %cst_46 = arith.constant 2.500000e-01 : f32
      %49 = vector.broadcast %cst_46 : f32 to vector<16x16xf32>
      %50 = arith.mulf %48, %49 : vector<16x16xf32>
      %c0_47 = arith.constant 0 : index
      %c3_48 = arith.constant 3 : index
      %c3_49 = arith.constant 3 : index
      %51 = vector.load %arg7[%c0_47, %c3_48, %c3_49] : memref<2x22x22xf32, #tpu.memory_space<vmem>>, vector<1x16x16xf32>
      %52 = vector.shape_cast %51 : vector<1x16x16xf32> to vector<16x16xf32>
      %53 = vector.shape_cast %50 : vector<16x16xf32> to vector<1x16x16xf32>
      tpu.vector_store %arg7[%c0_47, %c3_48, %c3_49], %53 {strides = array<i32>} : memref<2x22x22xf32, #tpu.memory_space<vmem>>, vector<1x16x16xf32>,
      %c0_50 = arith.constant 0 : index
      %c0_51 = arith.constant 0 : index
      %54 = vector.load %arg6[%c0_50, %c0_51] : memref<16x16xf32, #tpu.memory_space<vmem>>, vector<16x16xf32>
      %c1_52 = arith.constant 1 : index
      %c3_53 = arith.constant 3 : index
      %c3_54 = arith.constant 3 : index
      %55 = vector.load %arg7[%c1_52, %c3_53, %c3_54] : memref<2x22x22xf32, #tpu.memory_space<vmem>>, vector<1x16x16xf32>
      %56 = vector.shape_cast %55 : vector<1x16x16xf32> to vector<16x16xf32>
      %57 = vector.shape_cast %54 : vector<16x16xf32> to vector<1x16x16xf32>
      tpu.vector_store %arg7[%c1_52, %c3_53, %c3_54], %57 {strides = array<i32>} : memref<2x22x22xf32, #tpu.memory_space<vmem>>, vector<1x16x16xf32>,
      %cst_55 = arith.constant 0.000000e+00 : f32
      %58 = vector.broadcast %cst_55 : f32 to vector<16x16xf32>
      %c0_56 = arith.constant 0 : index
      %c0_57 = arith.constant 0 : index
      %c0_58 = arith.constant 0 : index
      %59 = vector.load %arg7[%c0_56, %c0_57, %c0_58] : memref<2x22x22xf32, #tpu.memory_space<vmem>>, vector<1x22x22xf32>
      %60 = vector.shape_cast %59 : vector<1x22x22xf32> to vector<22x22xf32>
      %61 = vector.extract_strided_slice %60 {offsets = [0, 0], sizes = [22, 16], strides = [1, 1]} : vector<22x22xf32> to vector<22x16xf32>
      %c0_59 = arith.constant 0 : index
      %62 = memref.load %arg3[%c0_59] : memref<98xf32, #tpu.memory_space<smem>>
      %63 = vector.extract_strided_slice %61 {offsets = [0, 0], sizes = [16, 16], strides = [1, 1]} : vector<22x16xf32> to vector<16x16xf32>
      %64 = vector.broadcast %62 : f32 to vector<16x16xf32>
      %65 = arith.mulf %64, %63 : vector<16x16xf32>
      %66 = arith.addf %58, %65 : vector<16x16xf32>
      %c7 = arith.constant 7 : index
      %67 = memref.load %arg3[%c7] : memref<98xf32, #tpu.memory_space<smem>>
      %68 = vector.extract_strided_slice %61 {offsets = [1, 0], sizes = [16, 16], strides = [1, 1]} : vector<22x16xf32> to vector<16x16xf32>
      %69 = vector.broadcast %67 : f32 to vector<16x16xf32>
      %70 = arith.mulf %69, %68 : vector<16x16xf32>
      %71 = arith.addf %66, %70 : vector<16x16xf32>
      %c14 = arith.constant 14 : index
      %72 = memref.load %arg3[%c14] : memref<98xf32, #tpu.memory_space<smem>>
      %73 = vector.extract_strided_slice %61 {offsets = [2, 0], sizes = [16, 16], strides = [1, 1]} : vector<22x16xf32> to vector<16x16xf32>
      %74 = vector.broadcast %72 : f32 to vector<16x16xf32>
      %75 = arith.mulf %74, %73 : vector<16x16xf32>
      %76 = arith.addf %71, %75 : vector<16x16xf32>
      %c21 = arith.constant 21 : index
      %77 = memref.load %arg3[%c21] : memref<98xf32, #tpu.memory_space<smem>>
      %78 = vector.extract_strided_slice %61 {offsets = [3, 0], sizes = [16, 16], strides = [1, 1]} : vector<22x16xf32> to vector<16x16xf32>
      %79 = vector.broadcast %77 : f32 to vector<16x16xf32>
      %80 = arith.mulf %79, %78 : vector<16x16xf32>
      %81 = arith.addf %76, %80 : vector<16x16xf32>
      %c28 = arith.constant 28 : index
      %82 = memref.load %arg3[%c28] : memref<98xf32, #tpu.memory_space<smem>>
      %83 = vector.extract_strided_slice %61 {offsets = [4, 0], sizes = [16, 16], strides = [1, 1]} : vector<22x16xf32> to vector<16x16xf32>
      %84 = vector.broadcast %82 : f32 to vector<16x16xf32>
      %85 = arith.mulf %84, %83 : vector<16x16xf32>
      %86 = arith.addf %81, %85 : vector<16x16xf32>
      %c35 = arith.constant 35 : index
      %87 = memref.load %arg3[%c35] : memref<98xf32, #tpu.memory_space<smem>>
      %88 = vector.extract_strided_slice %61 {offsets = [5, 0], sizes = [16, 16], strides = [1, 1]} : vector<22x16xf32> to vector<16x16xf32>
      %89 = vector.broadcast %87 : f32 to vector<16x16xf32>
      %90 = arith.mulf %89, %88 : vector<16x16xf32>
      %91 = arith.addf %86, %90 : vector<16x16xf32>
      %c42 = arith.constant 42 : index
      %92 = memref.load %arg3[%c42] : memref<98xf32, #tpu.memory_space<smem>>
      %93 = vector.extract_strided_slice %61 {offsets = [6, 0], sizes = [16, 16], strides = [1, 1]} : vector<22x16xf32> to vector<16x16xf32>
      %94 = vector.broadcast %92 : f32 to vector<16x16xf32>
      %95 = arith.mulf %94, %93 : vector<16x16xf32>
      %96 = arith.addf %91, %95 : vector<16x16xf32>
      %97 = vector.extract_strided_slice %60 {offsets = [0, 1], sizes = [22, 16], strides = [1, 1]} : vector<22x22xf32> to vector<22x16xf32>
      %c1_60 = arith.constant 1 : index
      %98 = memref.load %arg3[%c1_60] : memref<98xf32, #tpu.memory_space<smem>>
      %99 = vector.extract_strided_slice %97 {offsets = [0, 0], sizes = [16, 16], strides = [1, 1]} : vector<22x16xf32> to vector<16x16xf32>
      %100 = vector.broadcast %98 : f32 to vector<16x16xf32>
      %101 = arith.mulf %100, %99 : vector<16x16xf32>
      %102 = arith.addf %96, %101 : vector<16x16xf32>
      %c8 = arith.constant 8 : index
      %103 = memref.load %arg3[%c8] : memref<98xf32, #tpu.memory_space<smem>>
      %104 = vector.extract_strided_slice %97 {offsets = [1, 0], sizes = [16, 16], strides = [1, 1]} : vector<22x16xf32> to vector<16x16xf32>
      %105 = vector.broadcast %103 : f32 to vector<16x16xf32>
      %106 = arith.mulf %105, %104 : vector<16x16xf32>
      %107 = arith.addf %102, %106 : vector<16x16xf32>
      %c15 = arith.constant 15 : index
      %108 = memref.load %arg3[%c15] : memref<98xf32, #tpu.memory_space<smem>>
      %109 = vector.extract_strided_slice %97 {offsets = [2, 0], sizes = [16, 16], strides = [1, 1]} : vector<22x16xf32> to vector<16x16xf32>
      %110 = vector.broadcast %108 : f32 to vector<16x16xf32>
      %111 = arith.mulf %110, %109 : vector<16x16xf32>
      %112 = arith.addf %107, %111 : vector<16x16xf32>
      %c22 = arith.constant 22 : index
      %113 = memref.load %arg3[%c22] : memref<98xf32, #tpu.memory_space<smem>>
      %114 = vector.extract_strided_slice %97 {offsets = [3, 0], sizes = [16, 16], strides = [1, 1]} : vector<22x16xf32> to vector<16x16xf32>
      %115 = vector.broadcast %113 : f32 to vector<16x16xf32>
      %116 = arith.mulf %115, %114 : vector<16x16xf32>
      %117 = arith.addf %112, %116 : vector<16x16xf32>
      %c29 = arith.constant 29 : index
      %118 = memref.load %arg3[%c29] : memref<98xf32, #tpu.memory_space<smem>>
      %119 = vector.extract_strided_slice %97 {offsets = [4, 0], sizes = [16, 16], strides = [1, 1]} : vector<22x16xf32> to vector<16x16xf32>
      %120 = vector.broadcast %118 : f32 to vector<16x16xf32>
      %121 = arith.mulf %120, %119 : vector<16x16xf32>
      %122 = arith.addf %117, %121 : vector<16x16xf32>
      %c36 = arith.constant 36 : index
      %123 = memref.load %arg3[%c36] : memref<98xf32, #tpu.memory_space<smem>>
      %124 = vector.extract_strided_slice %97 {offsets = [5, 0], sizes = [16, 16], strides = [1, 1]} : vector<22x16xf32> to vector<16x16xf32>
      %125 = vector.broadcast %123 : f32 to vector<16x16xf32>
      %126 = arith.mulf %125, %124 : vector<16x16xf32>
      %127 = arith.addf %122, %126 : vector<16x16xf32>
      %c43 = arith.constant 43 : index
      %128 = memref.load %arg3[%c43] : memref<98xf32, #tpu.memory_space<smem>>
      %129 = vector.extract_strided_slice %97 {offsets = [6, 0], sizes = [16, 16], strides = [1, 1]} : vector<22x16xf32> to vector<16x16xf32>
      %130 = vector.broadcast %128 : f32 to vector<16x16xf32>
      %131 = arith.mulf %130, %129 : vector<16x16xf32>
      %132 = arith.addf %127, %131 : vector<16x16xf32>
      %133 = vector.extract_strided_slice %60 {offsets = [0, 2], sizes = [22, 16], strides = [1, 1]} : vector<22x22xf32> to vector<22x16xf32>
      %c2 = arith.constant 2 : index
      %134 = memref.load %arg3[%c2] : memref<98xf32, #tpu.memory_space<smem>>
      %135 = vector.extract_strided_slice %133 {offsets = [0, 0], sizes = [16, 16], strides = [1, 1]} : vector<22x16xf32> to vector<16x16xf32>
      %136 = vector.broadcast %134 : f32 to vector<16x16xf32>
      %137 = arith.mulf %136, %135 : vector<16x16xf32>
      %138 = arith.addf %132, %137 : vector<16x16xf32>
      %c9 = arith.constant 9 : index
      %139 = memref.load %arg3[%c9] : memref<98xf32, #tpu.memory_space<smem>>
      %140 = vector.extract_strided_slice %133 {offsets = [1, 0], sizes = [16, 16], strides = [1, 1]} : vector<22x16xf32> to vector<16x16xf32>
      %141 = vector.broadcast %139 : f32 to vector<16x16xf32>
      %142 = arith.mulf %141, %140 : vector<16x16xf32>
      %143 = arith.addf %138, %142 : vector<16x16xf32>
      %c16 = arith.constant 16 : index
      %144 = memref.load %arg3[%c16] : memref<98xf32, #tpu.memory_space<smem>>
      %145 = vector.extract_strided_slice %133 {offsets = [2, 0], sizes = [16, 16], strides = [1, 1]} : vector<22x16xf32> to vector<16x16xf32>
      %146 = vector.broadcast %144 : f32 to vector<16x16xf32>
      %147 = arith.mulf %146, %145 : vector<16x16xf32>
      %148 = arith.addf %143, %147 : vector<16x16xf32>
      %c23 = arith.constant 23 : index
      %149 = memref.load %arg3[%c23] : memref<98xf32, #tpu.memory_space<smem>>
      %150 = vector.extract_strided_slice %133 {offsets = [3, 0], sizes = [16, 16], strides = [1, 1]} : vector<22x16xf32> to vector<16x16xf32>
      %151 = vector.broadcast %149 : f32 to vector<16x16xf32>
      %152 = arith.mulf %151, %150 : vector<16x16xf32>
      %153 = arith.addf %148, %152 : vector<16x16xf32>
      %c30 = arith.constant 30 : index
      %154 = memref.load %arg3[%c30] : memref<98xf32, #tpu.memory_space<smem>>
      %155 = vector.extract_strided_slice %133 {offsets = [4, 0], sizes = [16, 16], strides = [1, 1]} : vector<22x16xf32> to vector<16x16xf32>
      %156 = vector.broadcast %154 : f32 to vector<16x16xf32>
      %157 = arith.mulf %156, %155 : vector<16x16xf32>
      %158 = arith.addf %153, %157 : vector<16x16xf32>
      %c37 = arith.constant 37 : index
      %159 = memref.load %arg3[%c37] : memref<98xf32, #tpu.memory_space<smem>>
      %160 = vector.extract_strided_slice %133 {offsets = [5, 0], sizes = [16, 16], strides = [1, 1]} : vector<22x16xf32> to vector<16x16xf32>
      %161 = vector.broadcast %159 : f32 to vector<16x16xf32>
      %162 = arith.mulf %161, %160 : vector<16x16xf32>
      %163 = arith.addf %158, %162 : vector<16x16xf32>
      %c44 = arith.constant 44 : index
      %164 = memref.load %arg3[%c44] : memref<98xf32, #tpu.memory_space<smem>>
      %165 = vector.extract_strided_slice %133 {offsets = [6, 0], sizes = [16, 16], strides = [1, 1]} : vector<22x16xf32> to vector<16x16xf32>
      %166 = vector.broadcast %164 : f32 to vector<16x16xf32>
      %167 = arith.mulf %166, %165 : vector<16x16xf32>
      %168 = arith.addf %163, %167 : vector<16x16xf32>
      %169 = vector.extract_strided_slice %60 {offsets = [0, 3], sizes = [22, 16], strides = [1, 1]} : vector<22x22xf32> to vector<22x16xf32>
      %c3_61 = arith.constant 3 : index
      %170 = memref.load %arg3[%c3_61] : memref<98xf32, #tpu.memory_space<smem>>
      %171 = vector.extract_strided_slice %169 {offsets = [0, 0], sizes = [16, 16], strides = [1, 1]} : vector<22x16xf32> to vector<16x16xf32>
      %172 = vector.broadcast %170 : f32 to vector<16x16xf32>
      %173 = arith.mulf %172, %171 : vector<16x16xf32>
      %174 = arith.addf %168, %173 : vector<16x16xf32>
      %c10 = arith.constant 10 : index
      %175 = memref.load %arg3[%c10] : memref<98xf32, #tpu.memory_space<smem>>
      %176 = vector.extract_strided_slice %169 {offsets = [1, 0], sizes = [16, 16], strides = [1, 1]} : vector<22x16xf32> to vector<16x16xf32>
      %177 = vector.broadcast %175 : f32 to vector<16x16xf32>
      %178 = arith.mulf %177, %176 : vector<16x16xf32>
      %179 = arith.addf %174, %178 : vector<16x16xf32>
      %c17 = arith.constant 17 : index
      %180 = memref.load %arg3[%c17] : memref<98xf32, #tpu.memory_space<smem>>
      %181 = vector.extract_strided_slice %169 {offsets = [2, 0], sizes = [16, 16], strides = [1, 1]} : vector<22x16xf32> to vector<16x16xf32>
      %182 = vector.broadcast %180 : f32 to vector<16x16xf32>
      %183 = arith.mulf %182, %181 : vector<16x16xf32>
      %184 = arith.addf %179, %183 : vector<16x16xf32>
      %c24 = arith.constant 24 : index
      %185 = memref.load %arg3[%c24] : memref<98xf32, #tpu.memory_space<smem>>
      %186 = vector.extract_strided_slice %169 {offsets = [3, 0], sizes = [16, 16], strides = [1, 1]} : vector<22x16xf32> to vector<16x16xf32>
      %187 = vector.broadcast %185 : f32 to vector<16x16xf32>
      %188 = arith.mulf %187, %186 : vector<16x16xf32>
      %189 = arith.addf %184, %188 : vector<16x16xf32>
      %c31 = arith.constant 31 : index
      %190 = memref.load %arg3[%c31] : memref<98xf32, #tpu.memory_space<smem>>
      %191 = vector.extract_strided_slice %169 {offsets = [4, 0], sizes = [16, 16], strides = [1, 1]} : vector<22x16xf32> to vector<16x16xf32>
      %192 = vector.broadcast %190 : f32 to vector<16x16xf32>
      %193 = arith.mulf %192, %191 : vector<16x16xf32>
      %194 = arith.addf %189, %193 : vector<16x16xf32>
      %c38 = arith.constant 38 : index
      %195 = memref.load %arg3[%c38] : memref<98xf32, #tpu.memory_space<smem>>
      %196 = vector.extract_strided_slice %169 {offsets = [5, 0], sizes = [16, 16], strides = [1, 1]} : vector<22x16xf32> to vector<16x16xf32>
      %197 = vector.broadcast %195 : f32 to vector<16x16xf32>
      %198 = arith.mulf %197, %196 : vector<16x16xf32>
      %199 = arith.addf %194, %198 : vector<16x16xf32>
      %c45 = arith.constant 45 : index
      %200 = memref.load %arg3[%c45] : memref<98xf32, #tpu.memory_space<smem>>
      %201 = vector.extract_strided_slice %169 {offsets = [6, 0], sizes = [16, 16], strides = [1, 1]} : vector<22x16xf32> to vector<16x16xf32>
      %202 = vector.broadcast %200 : f32 to vector<16x16xf32>
      %203 = arith.mulf %202, %201 : vector<16x16xf32>
      %204 = arith.addf %199, %203 : vector<16x16xf32>
      %205 = vector.extract_strided_slice %60 {offsets = [0, 4], sizes = [22, 16], strides = [1, 1]} : vector<22x22xf32> to vector<22x16xf32>
      %c4 = arith.constant 4 : index
      %206 = memref.load %arg3[%c4] : memref<98xf32, #tpu.memory_space<smem>>
      %207 = vector.extract_strided_slice %205 {offsets = [0, 0], sizes = [16, 16], strides = [1, 1]} : vector<22x16xf32> to vector<16x16xf32>
      %208 = vector.broadcast %206 : f32 to vector<16x16xf32>
      %209 = arith.mulf %208, %207 : vector<16x16xf32>
      %210 = arith.addf %204, %209 : vector<16x16xf32>
      %c11 = arith.constant 11 : index
      %211 = memref.load %arg3[%c11] : memref<98xf32, #tpu.memory_space<smem>>
      %212 = vector.extract_strided_slice %205 {offsets = [1, 0], sizes = [16, 16], strides = [1, 1]} : vector<22x16xf32> to vector<16x16xf32>
      %213 = vector.broadcast %211 : f32 to vector<16x16xf32>
      %214 = arith.mulf %213, %212 : vector<16x16xf32>
      %215 = arith.addf %210, %214 : vector<16x16xf32>
      %c18 = arith.constant 18 : index
      %216 = memref.load %arg3[%c18] : memref<98xf32, #tpu.memory_space<smem>>
      %217 = vector.extract_strided_slice %205 {offsets = [2, 0], sizes = [16, 16], strides = [1, 1]} : vector<22x16xf32> to vector<16x16xf32>
      %218 = vector.broadcast %216 : f32 to vector<16x16xf32>
      %219 = arith.mulf %218, %217 : vector<16x16xf32>
      %220 = arith.addf %215, %219 : vector<16x16xf32>
      %c25 = arith.constant 25 : index
      %221 = memref.load %arg3[%c25] : memref<98xf32, #tpu.memory_space<smem>>
      %222 = vector.extract_strided_slice %205 {offsets = [3, 0], sizes = [16, 16], strides = [1, 1]} : vector<22x16xf32> to vector<16x16xf32>
      %223 = vector.broadcast %221 : f32 to vector<16x16xf32>
      %224 = arith.mulf %223, %222 : vector<16x16xf32>
      %225 = arith.addf %220, %224 : vector<16x16xf32>
      %c32 = arith.constant 32 : index
      %226 = memref.load %arg3[%c32] : memref<98xf32, #tpu.memory_space<smem>>
      %227 = vector.extract_strided_slice %205 {offsets = [4, 0], sizes = [16, 16], strides = [1, 1]} : vector<22x16xf32> to vector<16x16xf32>
      %228 = vector.broadcast %226 : f32 to vector<16x16xf32>
      %229 = arith.mulf %228, %227 : vector<16x16xf32>
      %230 = arith.addf %225, %229 : vector<16x16xf32>
      %c39 = arith.constant 39 : index
      %231 = memref.load %arg3[%c39] : memref<98xf32, #tpu.memory_space<smem>>
      %232 = vector.extract_strided_slice %205 {offsets = [5, 0], sizes = [16, 16], strides = [1, 1]} : vector<22x16xf32> to vector<16x16xf32>
      %233 = vector.broadcast %231 : f32 to vector<16x16xf32>
      %234 = arith.mulf %233, %232 : vector<16x16xf32>
      %235 = arith.addf %230, %234 : vector<16x16xf32>
      %c46 = arith.constant 46 : index
      %236 = memref.load %arg3[%c46] : memref<98xf32, #tpu.memory_space<smem>>
      %237 = vector.extract_strided_slice %205 {offsets = [6, 0], sizes = [16, 16], strides = [1, 1]} : vector<22x16xf32> to vector<16x16xf32>
      %238 = vector.broadcast %236 : f32 to vector<16x16xf32>
      %239 = arith.mulf %238, %237 : vector<16x16xf32>
      %240 = arith.addf %235, %239 : vector<16x16xf32>
      %241 = vector.extract_strided_slice %60 {offsets = [0, 5], sizes = [22, 16], strides = [1, 1]} : vector<22x22xf32> to vector<22x16xf32>
      %c5 = arith.constant 5 : index
      %242 = memref.load %arg3[%c5] : memref<98xf32, #tpu.memory_space<smem>>
      %243 = vector.extract_strided_slice %241 {offsets = [0, 0], sizes = [16, 16], strides = [1, 1]} : vector<22x16xf32> to vector<16x16xf32>
      %244 = vector.broadcast %242 : f32 to vector<16x16xf32>
      %245 = arith.mulf %244, %243 : vector<16x16xf32>
      %246 = arith.addf %240, %245 : vector<16x16xf32>
      %c12 = arith.constant 12 : index
      %247 = memref.load %arg3[%c12] : memref<98xf32, #tpu.memory_space<smem>>
      %248 = vector.extract_strided_slice %241 {offsets = [1, 0], sizes = [16, 16], strides = [1, 1]} : vector<22x16xf32> to vector<16x16xf32>
      %249 = vector.broadcast %247 : f32 to vector<16x16xf32>
      %250 = arith.mulf %249, %248 : vector<16x16xf32>
      %251 = arith.addf %246, %250 : vector<16x16xf32>
      %c19_62 = arith.constant 19 : index
      %252 = memref.load %arg3[%c19_62] : memref<98xf32, #tpu.memory_space<smem>>
      %253 = vector.extract_strided_slice %241 {offsets = [2, 0], sizes = [16, 16], strides = [1, 1]} : vector<22x16xf32> to vector<16x16xf32>
      %254 = vector.broadcast %252 : f32 to vector<16x16xf32>
      %255 = arith.mulf %254, %253 : vector<16x16xf32>
      %256 = arith.addf %251, %255 : vector<16x16xf32>
      %c26 = arith.constant 26 : index
      %257 = memref.load %arg3[%c26] : memref<98xf32, #tpu.memory_space<smem>>
      %258 = vector.extract_strided_slice %241 {offsets = [3, 0], sizes = [16, 16], strides = [1, 1]} : vector<22x16xf32> to vector<16x16xf32>
      %259 = vector.broadcast %257 : f32 to vector<16x16xf32>
      %260 = arith.mulf %259, %258 : vector<16x16xf32>
      %261 = arith.addf %256, %260 : vector<16x16xf32>
      %c33 = arith.constant 33 : index
      %262 = memref.load %arg3[%c33] : memref<98xf32, #tpu.memory_space<smem>>
      %263 = vector.extract_strided_slice %241 {offsets = [4, 0], sizes = [16, 16], strides = [1, 1]} : vector<22x16xf32> to vector<16x16xf32>
      %264 = vector.broadcast %262 : f32 to vector<16x16xf32>
      %265 = arith.mulf %264, %263 : vector<16x16xf32>
      %266 = arith.addf %261, %265 : vector<16x16xf32>
      %c40 = arith.constant 40 : index
      %267 = memref.load %arg3[%c40] : memref<98xf32, #tpu.memory_space<smem>>
      %268 = vector.extract_strided_slice %241 {offsets = [5, 0], sizes = [16, 16], strides = [1, 1]} : vector<22x16xf32> to vector<16x16xf32>
      %269 = vector.broadcast %267 : f32 to vector<16x16xf32>
      %270 = arith.mulf %269, %268 : vector<16x16xf32>
      %271 = arith.addf %266, %270 : vector<16x16xf32>
      %c47 = arith.constant 47 : index
      %272 = memref.load %arg3[%c47] : memref<98xf32, #tpu.memory_space<smem>>
      %273 = vector.extract_strided_slice %241 {offsets = [6, 0], sizes = [16, 16], strides = [1, 1]} : vector<22x16xf32> to vector<16x16xf32>
      %274 = vector.broadcast %272 : f32 to vector<16x16xf32>
      %275 = arith.mulf %274, %273 : vector<16x16xf32>
      %276 = arith.addf %271, %275 : vector<16x16xf32>
      %277 = vector.extract_strided_slice %60 {offsets = [0, 6], sizes = [22, 16], strides = [1, 1]} : vector<22x22xf32> to vector<22x16xf32>
      %c6 = arith.constant 6 : index
      %278 = memref.load %arg3[%c6] : memref<98xf32, #tpu.memory_space<smem>>
      %279 = vector.extract_strided_slice %277 {offsets = [0, 0], sizes = [16, 16], strides = [1, 1]} : vector<22x16xf32> to vector<16x16xf32>
      %280 = vector.broadcast %278 : f32 to vector<16x16xf32>
      %281 = arith.mulf %280, %279 : vector<16x16xf32>
      %282 = arith.addf %276, %281 : vector<16x16xf32>
      %c13 = arith.constant 13 : index
      %283 = memref.load %arg3[%c13] : memref<98xf32, #tpu.memory_space<smem>>
      %284 = vector.extract_strided_slice %277 {offsets = [1, 0], sizes = [16, 16], strides = [1, 1]} : vector<22x16xf32> to vector<16x16xf32>
      %285 = vector.broadcast %283 : f32 to vector<16x16xf32>
      %286 = arith.mulf %285, %284 : vector<16x16xf32>
      %287 = arith.addf %282, %286 : vector<16x16xf32>
      %c20 = arith.constant 20 : index
      %288 = memref.load %arg3[%c20] : memref<98xf32, #tpu.memory_space<smem>>
      %289 = vector.extract_strided_slice %277 {offsets = [2, 0], sizes = [16, 16], strides = [1, 1]} : vector<22x16xf32> to vector<16x16xf32>
      %290 = vector.broadcast %288 : f32 to vector<16x16xf32>
      %291 = arith.mulf %290, %289 : vector<16x16xf32>
      %292 = arith.addf %287, %291 : vector<16x16xf32>
      %c27 = arith.constant 27 : index
      %293 = memref.load %arg3[%c27] : memref<98xf32, #tpu.memory_space<smem>>
      %294 = vector.extract_strided_slice %277 {offsets = [3, 0], sizes = [16, 16], strides = [1, 1]} : vector<22x16xf32> to vector<16x16xf32>
      %295 = vector.broadcast %293 : f32 to vector<16x16xf32>
      %296 = arith.mulf %295, %294 : vector<16x16xf32>
      %297 = arith.addf %292, %296 : vector<16x16xf32>
      %c34 = arith.constant 34 : index
      %298 = memref.load %arg3[%c34] : memref<98xf32, #tpu.memory_space<smem>>
      %299 = vector.extract_strided_slice %277 {offsets = [4, 0], sizes = [16, 16], strides = [1, 1]} : vector<22x16xf32> to vector<16x16xf32>
      %300 = vector.broadcast %298 : f32 to vector<16x16xf32>
      %301 = arith.mulf %300, %299 : vector<16x16xf32>
      %302 = arith.addf %297, %301 : vector<16x16xf32>
      %c41 = arith.constant 41 : index
      %303 = memref.load %arg3[%c41] : memref<98xf32, #tpu.memory_space<smem>>
      %304 = vector.extract_strided_slice %277 {offsets = [5, 0], sizes = [16, 16], strides = [1, 1]} : vector<22x16xf32> to vector<16x16xf32>
      %305 = vector.broadcast %303 : f32 to vector<16x16xf32>
      %306 = arith.mulf %305, %304 : vector<16x16xf32>
      %307 = arith.addf %302, %306 : vector<16x16xf32>
      %c48 = arith.constant 48 : index
      %308 = memref.load %arg3[%c48] : memref<98xf32, #tpu.memory_space<smem>>
      %309 = vector.extract_strided_slice %277 {offsets = [6, 0], sizes = [16, 16], strides = [1, 1]} : vector<22x16xf32> to vector<16x16xf32>
      %310 = vector.broadcast %308 : f32 to vector<16x16xf32>
      %311 = arith.mulf %310, %309 : vector<16x16xf32>
      %312 = arith.addf %307, %311 : vector<16x16xf32>
      %c1_63 = arith.constant 1 : index
      %c0_64 = arith.constant 0 : index
      %c0_65 = arith.constant 0 : index
      %313 = vector.load %arg7[%c1_63, %c0_64, %c0_65] : memref<2x22x22xf32, #tpu.memory_space<vmem>>, vector<1x22x22xf32>
      %314 = vector.shape_cast %313 : vector<1x22x22xf32> to vector<22x22xf32>
      %315 = vector.extract_strided_slice %314 {offsets = [0, 0], sizes = [22, 16], strides = [1, 1]} : vector<22x22xf32> to vector<22x16xf32>
      %c49 = arith.constant 49 : index
      %316 = memref.load %arg3[%c49] : memref<98xf32, #tpu.memory_space<smem>>
      %317 = vector.extract_strided_slice %315 {offsets = [0, 0], sizes = [16, 16], strides = [1, 1]} : vector<22x16xf32> to vector<16x16xf32>
      %318 = vector.broadcast %316 : f32 to vector<16x16xf32>
      %319 = arith.mulf %318, %317 : vector<16x16xf32>
      %320 = arith.addf %312, %319 : vector<16x16xf32>
      %c56 = arith.constant 56 : index
      %321 = memref.load %arg3[%c56] : memref<98xf32, #tpu.memory_space<smem>>
      %322 = vector.extract_strided_slice %315 {offsets = [1, 0], sizes = [16, 16], strides = [1, 1]} : vector<22x16xf32> to vector<16x16xf32>
      %323 = vector.broadcast %321 : f32 to vector<16x16xf32>
      %324 = arith.mulf %323, %322 : vector<16x16xf32>
      %325 = arith.addf %320, %324 : vector<16x16xf32>
      %c63 = arith.constant 63 : index
      %326 = memref.load %arg3[%c63] : memref<98xf32, #tpu.memory_space<smem>>
      %327 = vector.extract_strided_slice %315 {offsets = [2, 0], sizes = [16, 16], strides = [1, 1]} : vector<22x16xf32> to vector<16x16xf32>
      %328 = vector.broadcast %326 : f32 to vector<16x16xf32>
      %329 = arith.mulf %328, %327 : vector<16x16xf32>
      %330 = arith.addf %325, %329 : vector<16x16xf32>
      %c70 = arith.constant 70 : index
      %331 = memref.load %arg3[%c70] : memref<98xf32, #tpu.memory_space<smem>>
      %332 = vector.extract_strided_slice %315 {offsets = [3, 0], sizes = [16, 16], strides = [1, 1]} : vector<22x16xf32> to vector<16x16xf32>
      %333 = vector.broadcast %331 : f32 to vector<16x16xf32>
      %334 = arith.mulf %333, %332 : vector<16x16xf32>
      %335 = arith.addf %330, %334 : vector<16x16xf32>
      %c77 = arith.constant 77 : index
      %336 = memref.load %arg3[%c77] : memref<98xf32, #tpu.memory_space<smem>>
      %337 = vector.extract_strided_slice %315 {offsets = [4, 0], sizes = [16, 16], strides = [1, 1]} : vector<22x16xf32> to vector<16x16xf32>
      %338 = vector.broadcast %336 : f32 to vector<16x16xf32>
      %339 = arith.mulf %338, %337 : vector<16x16xf32>
      %340 = arith.addf %335, %339 : vector<16x16xf32>
      %c84 = arith.constant 84 : index
      %341 = memref.load %arg3[%c84] : memref<98xf32, #tpu.memory_space<smem>>
      %342 = vector.extract_strided_slice %315 {offsets = [5, 0], sizes = [16, 16], strides = [1, 1]} : vector<22x16xf32> to vector<16x16xf32>
      %343 = vector.broadcast %341 : f32 to vector<16x16xf32>
      %344 = arith.mulf %343, %342 : vector<16x16xf32>
      %345 = arith.addf %340, %344 : vector<16x16xf32>
      %c91 = arith.constant 91 : index
      %346 = memref.load %arg3[%c91] : memref<98xf32, #tpu.memory_space<smem>>
      %347 = vector.extract_strided_slice %315 {offsets = [6, 0], sizes = [16, 16], strides = [1, 1]} : vector<22x16xf32> to vector<16x16xf32>
      %348 = vector.broadcast %346 : f32 to vector<16x16xf32>
      %349 = arith.mulf %348, %347 : vector<16x16xf32>
      %350 = arith.addf %345, %349 : vector<16x16xf32>
      %351 = vector.extract_strided_slice %314 {offsets = [0, 1], sizes = [22, 16], strides = [1, 1]} : vector<22x22xf32> to vector<22x16xf32>
      %c50 = arith.constant 50 : index
      %352 = memref.load %arg3[%c50] : memref<98xf32, #tpu.memory_space<smem>>
      %353 = vector.extract_strided_slice %351 {offsets = [0, 0], sizes = [16, 16], strides = [1, 1]} : vector<22x16xf32> to vector<16x16xf32>
      %354 = vector.broadcast %352 : f32 to vector<16x16xf32>
      %355 = arith.mulf %354, %353 : vector<16x16xf32>
      %356 = arith.addf %350, %355 : vector<16x16xf32>
      %c57 = arith.constant 57 : index
      %357 = memref.load %arg3[%c57] : memref<98xf32, #tpu.memory_space<smem>>
      %358 = vector.extract_strided_slice %351 {offsets = [1, 0], sizes = [16, 16], strides = [1, 1]} : vector<22x16xf32> to vector<16x16xf32>
      %359 = vector.broadcast %357 : f32 to vector<16x16xf32>
      %360 = arith.mulf %359, %358 : vector<16x16xf32>
      %361 = arith.addf %356, %360 : vector<16x16xf32>
      %c64 = arith.constant 64 : index
      %362 = memref.load %arg3[%c64] : memref<98xf32, #tpu.memory_space<smem>>
      %363 = vector.extract_strided_slice %351 {offsets = [2, 0], sizes = [16, 16], strides = [1, 1]} : vector<22x16xf32> to vector<16x16xf32>
      %364 = vector.broadcast %362 : f32 to vector<16x16xf32>
      %365 = arith.mulf %364, %363 : vector<16x16xf32>
      %366 = arith.addf %361, %365 : vector<16x16xf32>
      %c71 = arith.constant 71 : index
      %367 = memref.load %arg3[%c71] : memref<98xf32, #tpu.memory_space<smem>>
      %368 = vector.extract_strided_slice %351 {offsets = [3, 0], sizes = [16, 16], strides = [1, 1]} : vector<22x16xf32> to vector<16x16xf32>
      %369 = vector.broadcast %367 : f32 to vector<16x16xf32>
      %370 = arith.mulf %369, %368 : vector<16x16xf32>
      %371 = arith.addf %366, %370 : vector<16x16xf32>
      %c78 = arith.constant 78 : index
      %372 = memref.load %arg3[%c78] : memref<98xf32, #tpu.memory_space<smem>>
      %373 = vector.extract_strided_slice %351 {offsets = [4, 0], sizes = [16, 16], strides = [1, 1]} : vector<22x16xf32> to vector<16x16xf32>
      %374 = vector.broadcast %372 : f32 to vector<16x16xf32>
      %375 = arith.mulf %374, %373 : vector<16x16xf32>
      %376 = arith.addf %371, %375 : vector<16x16xf32>
      %c85 = arith.constant 85 : index
      %377 = memref.load %arg3[%c85] : memref<98xf32, #tpu.memory_space<smem>>
      %378 = vector.extract_strided_slice %351 {offsets = [5, 0], sizes = [16, 16], strides = [1, 1]} : vector<22x16xf32> to vector<16x16xf32>
      %379 = vector.broadcast %377 : f32 to vector<16x16xf32>
      %380 = arith.mulf %379, %378 : vector<16x16xf32>
      %381 = arith.addf %376, %380 : vector<16x16xf32>
      %c92 = arith.constant 92 : index
      %382 = memref.load %arg3[%c92] : memref<98xf32, #tpu.memory_space<smem>>
      %383 = vector.extract_strided_slice %351 {offsets = [6, 0], sizes = [16, 16], strides = [1, 1]} : vector<22x16xf32> to vector<16x16xf32>
      %384 = vector.broadcast %382 : f32 to vector<16x16xf32>
      %385 = arith.mulf %384, %383 : vector<16x16xf32>
      %386 = arith.addf %381, %385 : vector<16x16xf32>
      %387 = vector.extract_strided_slice %314 {offsets = [0, 2], sizes = [22, 16], strides = [1, 1]} : vector<22x22xf32> to vector<22x16xf32>
      %c51 = arith.constant 51 : index
      %388 = memref.load %arg3[%c51] : memref<98xf32, #tpu.memory_space<smem>>
      %389 = vector.extract_strided_slice %387 {offsets = [0, 0], sizes = [16, 16], strides = [1, 1]} : vector<22x16xf32> to vector<16x16xf32>
      %390 = vector.broadcast %388 : f32 to vector<16x16xf32>
      %391 = arith.mulf %390, %389 : vector<16x16xf32>
      %392 = arith.addf %386, %391 : vector<16x16xf32>
      %c58 = arith.constant 58 : index
      %393 = memref.load %arg3[%c58] : memref<98xf32, #tpu.memory_space<smem>>
      %394 = vector.extract_strided_slice %387 {offsets = [1, 0], sizes = [16, 16], strides = [1, 1]} : vector<22x16xf32> to vector<16x16xf32>
      %395 = vector.broadcast %393 : f32 to vector<16x16xf32>
      %396 = arith.mulf %395, %394 : vector<16x16xf32>
      %397 = arith.addf %392, %396 : vector<16x16xf32>
      %c65 = arith.constant 65 : index
      %398 = memref.load %arg3[%c65] : memref<98xf32, #tpu.memory_space<smem>>
      %399 = vector.extract_strided_slice %387 {offsets = [2, 0], sizes = [16, 16], strides = [1, 1]} : vector<22x16xf32> to vector<16x16xf32>
      %400 = vector.broadcast %398 : f32 to vector<16x16xf32>
      %401 = arith.mulf %400, %399 : vector<16x16xf32>
      %402 = arith.addf %397, %401 : vector<16x16xf32>
      %c72 = arith.constant 72 : index
      %403 = memref.load %arg3[%c72] : memref<98xf32, #tpu.memory_space<smem>>
      %404 = vector.extract_strided_slice %387 {offsets = [3, 0], sizes = [16, 16], strides = [1, 1]} : vector<22x16xf32> to vector<16x16xf32>
      %405 = vector.broadcast %403 : f32 to vector<16x16xf32>
      %406 = arith.mulf %405, %404 : vector<16x16xf32>
      %407 = arith.addf %402, %406 : vector<16x16xf32>
      %c79 = arith.constant 79 : index
      %408 = memref.load %arg3[%c79] : memref<98xf32, #tpu.memory_space<smem>>
      %409 = vector.extract_strided_slice %387 {offsets = [4, 0], sizes = [16, 16], strides = [1, 1]} : vector<22x16xf32> to vector<16x16xf32>
      %410 = vector.broadcast %408 : f32 to vector<16x16xf32>
      %411 = arith.mulf %410, %409 : vector<16x16xf32>
      %412 = arith.addf %407, %411 : vector<16x16xf32>
      %c86 = arith.constant 86 : index
      %413 = memref.load %arg3[%c86] : memref<98xf32, #tpu.memory_space<smem>>
      %414 = vector.extract_strided_slice %387 {offsets = [5, 0], sizes = [16, 16], strides = [1, 1]} : vector<22x16xf32> to vector<16x16xf32>
      %415 = vector.broadcast %413 : f32 to vector<16x16xf32>
      %416 = arith.mulf %415, %414 : vector<16x16xf32>
      %417 = arith.addf %412, %416 : vector<16x16xf32>
      %c93 = arith.constant 93 : index
      %418 = memref.load %arg3[%c93] : memref<98xf32, #tpu.memory_space<smem>>
      %419 = vector.extract_strided_slice %387 {offsets = [6, 0], sizes = [16, 16], strides = [1, 1]} : vector<22x16xf32> to vector<16x16xf32>
      %420 = vector.broadcast %418 : f32 to vector<16x16xf32>
      %421 = arith.mulf %420, %419 : vector<16x16xf32>
      %422 = arith.addf %417, %421 : vector<16x16xf32>
      %423 = vector.extract_strided_slice %314 {offsets = [0, 3], sizes = [22, 16], strides = [1, 1]} : vector<22x22xf32> to vector<22x16xf32>
      %c52 = arith.constant 52 : index
      %424 = memref.load %arg3[%c52] : memref<98xf32, #tpu.memory_space<smem>>
      %425 = vector.extract_strided_slice %423 {offsets = [0, 0], sizes = [16, 16], strides = [1, 1]} : vector<22x16xf32> to vector<16x16xf32>
      %426 = vector.broadcast %424 : f32 to vector<16x16xf32>
      %427 = arith.mulf %426, %425 : vector<16x16xf32>
      %428 = arith.addf %422, %427 : vector<16x16xf32>
      %c59 = arith.constant 59 : index
      %429 = memref.load %arg3[%c59] : memref<98xf32, #tpu.memory_space<smem>>
      %430 = vector.extract_strided_slice %423 {offsets = [1, 0], sizes = [16, 16], strides = [1, 1]} : vector<22x16xf32> to vector<16x16xf32>
      %431 = vector.broadcast %429 : f32 to vector<16x16xf32>
      %432 = arith.mulf %431, %430 : vector<16x16xf32>
      %433 = arith.addf %428, %432 : vector<16x16xf32>
      %c66 = arith.constant 66 : index
      %434 = memref.load %arg3[%c66] : memref<98xf32, #tpu.memory_space<smem>>
      %435 = vector.extract_strided_slice %423 {offsets = [2, 0], sizes = [16, 16], strides = [1, 1]} : vector<22x16xf32> to vector<16x16xf32>
      %436 = vector.broadcast %434 : f32 to vector<16x16xf32>
      %437 = arith.mulf %436, %435 : vector<16x16xf32>
      %438 = arith.addf %433, %437 : vector<16x16xf32>
      %c73 = arith.constant 73 : index
      %439 = memref.load %arg3[%c73] : memref<98xf32, #tpu.memory_space<smem>>
      %440 = vector.extract_strided_slice %423 {offsets = [3, 0], sizes = [16, 16], strides = [1, 1]} : vector<22x16xf32> to vector<16x16xf32>
      %441 = vector.broadcast %439 : f32 to vector<16x16xf32>
      %442 = arith.mulf %441, %440 : vector<16x16xf32>
      %443 = arith.addf %438, %442 : vector<16x16xf32>
      %c80 = arith.constant 80 : index
      %444 = memref.load %arg3[%c80] : memref<98xf32, #tpu.memory_space<smem>>
      %445 = vector.extract_strided_slice %423 {offsets = [4, 0], sizes = [16, 16], strides = [1, 1]} : vector<22x16xf32> to vector<16x16xf32>
      %446 = vector.broadcast %444 : f32 to vector<16x16xf32>
      %447 = arith.mulf %446, %445 : vector<16x16xf32>
      %448 = arith.addf %443, %447 : vector<16x16xf32>
      %c87 = arith.constant 87 : index
      %449 = memref.load %arg3[%c87] : memref<98xf32, #tpu.memory_space<smem>>
      %450 = vector.extract_strided_slice %423 {offsets = [5, 0], sizes = [16, 16], strides = [1, 1]} : vector<22x16xf32> to vector<16x16xf32>
      %451 = vector.broadcast %449 : f32 to vector<16x16xf32>
      %452 = arith.mulf %451, %450 : vector<16x16xf32>
      %453 = arith.addf %448, %452 : vector<16x16xf32>
      %c94 = arith.constant 94 : index
      %454 = memref.load %arg3[%c94] : memref<98xf32, #tpu.memory_space<smem>>
      %455 = vector.extract_strided_slice %423 {offsets = [6, 0], sizes = [16, 16], strides = [1, 1]} : vector<22x16xf32> to vector<16x16xf32>
      %456 = vector.broadcast %454 : f32 to vector<16x16xf32>
      %457 = arith.mulf %456, %455 : vector<16x16xf32>
      %458 = arith.addf %453, %457 : vector<16x16xf32>
      %459 = vector.extract_strided_slice %314 {offsets = [0, 4], sizes = [22, 16], strides = [1, 1]} : vector<22x22xf32> to vector<22x16xf32>
      %c53 = arith.constant 53 : index
      %460 = memref.load %arg3[%c53] : memref<98xf32, #tpu.memory_space<smem>>
      %461 = vector.extract_strided_slice %459 {offsets = [0, 0], sizes = [16, 16], strides = [1, 1]} : vector<22x16xf32> to vector<16x16xf32>
      %462 = vector.broadcast %460 : f32 to vector<16x16xf32>
      %463 = arith.mulf %462, %461 : vector<16x16xf32>
      %464 = arith.addf %458, %463 : vector<16x16xf32>
      %c60 = arith.constant 60 : index
      %465 = memref.load %arg3[%c60] : memref<98xf32, #tpu.memory_space<smem>>
      %466 = vector.extract_strided_slice %459 {offsets = [1, 0], sizes = [16, 16], strides = [1, 1]} : vector<22x16xf32> to vector<16x16xf32>
      %467 = vector.broadcast %465 : f32 to vector<16x16xf32>
      %468 = arith.mulf %467, %466 : vector<16x16xf32>
      %469 = arith.addf %464, %468 : vector<16x16xf32>
      %c67 = arith.constant 67 : index
      %470 = memref.load %arg3[%c67] : memref<98xf32, #tpu.memory_space<smem>>
      %471 = vector.extract_strided_slice %459 {offsets = [2, 0], sizes = [16, 16], strides = [1, 1]} : vector<22x16xf32> to vector<16x16xf32>
      %472 = vector.broadcast %470 : f32 to vector<16x16xf32>
      %473 = arith.mulf %472, %471 : vector<16x16xf32>
      %474 = arith.addf %469, %473 : vector<16x16xf32>
      %c74 = arith.constant 74 : index
      %475 = memref.load %arg3[%c74] : memref<98xf32, #tpu.memory_space<smem>>
      %476 = vector.extract_strided_slice %459 {offsets = [3, 0], sizes = [16, 16], strides = [1, 1]} : vector<22x16xf32> to vector<16x16xf32>
      %477 = vector.broadcast %475 : f32 to vector<16x16xf32>
      %478 = arith.mulf %477, %476 : vector<16x16xf32>
      %479 = arith.addf %474, %478 : vector<16x16xf32>
      %c81 = arith.constant 81 : index
      %480 = memref.load %arg3[%c81] : memref<98xf32, #tpu.memory_space<smem>>
      %481 = vector.extract_strided_slice %459 {offsets = [4, 0], sizes = [16, 16], strides = [1, 1]} : vector<22x16xf32> to vector<16x16xf32>
      %482 = vector.broadcast %480 : f32 to vector<16x16xf32>
      %483 = arith.mulf %482, %481 : vector<16x16xf32>
      %484 = arith.addf %479, %483 : vector<16x16xf32>
      %c88 = arith.constant 88 : index
      %485 = memref.load %arg3[%c88] : memref<98xf32, #tpu.memory_space<smem>>
      %486 = vector.extract_strided_slice %459 {offsets = [5, 0], sizes = [16, 16], strides = [1, 1]} : vector<22x16xf32> to vector<16x16xf32>
      %487 = vector.broadcast %485 : f32 to vector<16x16xf32>
      %488 = arith.mulf %487, %486 : vector<16x16xf32>
      %489 = arith.addf %484, %488 : vector<16x16xf32>
      %c95 = arith.constant 95 : index
      %490 = memref.load %arg3[%c95] : memref<98xf32, #tpu.memory_space<smem>>
      %491 = vector.extract_strided_slice %459 {offsets = [6, 0], sizes = [16, 16], strides = [1, 1]} : vector<22x16xf32> to vector<16x16xf32>
      %492 = vector.broadcast %490 : f32 to vector<16x16xf32>
      %493 = arith.mulf %492, %491 : vector<16x16xf32>
      %494 = arith.addf %489, %493 : vector<16x16xf32>
      %495 = vector.extract_strided_slice %314 {offsets = [0, 5], sizes = [22, 16], strides = [1, 1]} : vector<22x22xf32> to vector<22x16xf32>
      %c54 = arith.constant 54 : index
      %496 = memref.load %arg3[%c54] : memref<98xf32, #tpu.memory_space<smem>>
      %497 = vector.extract_strided_slice %495 {offsets = [0, 0], sizes = [16, 16], strides = [1, 1]} : vector<22x16xf32> to vector<16x16xf32>
      %498 = vector.broadcast %496 : f32 to vector<16x16xf32>
      %499 = arith.mulf %498, %497 : vector<16x16xf32>
      %500 = arith.addf %494, %499 : vector<16x16xf32>
      %c61 = arith.constant 61 : index
      %501 = memref.load %arg3[%c61] : memref<98xf32, #tpu.memory_space<smem>>
      %502 = vector.extract_strided_slice %495 {offsets = [1, 0], sizes = [16, 16], strides = [1, 1]} : vector<22x16xf32> to vector<16x16xf32>
      %503 = vector.broadcast %501 : f32 to vector<16x16xf32>
      %504 = arith.mulf %503, %502 : vector<16x16xf32>
      %505 = arith.addf %500, %504 : vector<16x16xf32>
      %c68 = arith.constant 68 : index
      %506 = memref.load %arg3[%c68] : memref<98xf32, #tpu.memory_space<smem>>
      %507 = vector.extract_strided_slice %495 {offsets = [2, 0], sizes = [16, 16], strides = [1, 1]} : vector<22x16xf32> to vector<16x16xf32>
      %508 = vector.broadcast %506 : f32 to vector<16x16xf32>
      %509 = arith.mulf %508, %507 : vector<16x16xf32>
      %510 = arith.addf %505, %509 : vector<16x16xf32>
      %c75 = arith.constant 75 : index
      %511 = memref.load %arg3[%c75] : memref<98xf32, #tpu.memory_space<smem>>
      %512 = vector.extract_strided_slice %495 {offsets = [3, 0], sizes = [16, 16], strides = [1, 1]} : vector<22x16xf32> to vector<16x16xf32>
      %513 = vector.broadcast %511 : f32 to vector<16x16xf32>
      %514 = arith.mulf %513, %512 : vector<16x16xf32>
      %515 = arith.addf %510, %514 : vector<16x16xf32>
      %c82 = arith.constant 82 : index
      %516 = memref.load %arg3[%c82] : memref<98xf32, #tpu.memory_space<smem>>
      %517 = vector.extract_strided_slice %495 {offsets = [4, 0], sizes = [16, 16], strides = [1, 1]} : vector<22x16xf32> to vector<16x16xf32>
      %518 = vector.broadcast %516 : f32 to vector<16x16xf32>
      %519 = arith.mulf %518, %517 : vector<16x16xf32>
      %520 = arith.addf %515, %519 : vector<16x16xf32>
      %c89 = arith.constant 89 : index
      %521 = memref.load %arg3[%c89] : memref<98xf32, #tpu.memory_space<smem>>
      %522 = vector.extract_strided_slice %495 {offsets = [5, 0], sizes = [16, 16], strides = [1, 1]} : vector<22x16xf32> to vector<16x16xf32>
      %523 = vector.broadcast %521 : f32 to vector<16x16xf32>
      %524 = arith.mulf %523, %522 : vector<16x16xf32>
      %525 = arith.addf %520, %524 : vector<16x16xf32>
      %c96 = arith.constant 96 : index
      %526 = memref.load %arg3[%c96] : memref<98xf32, #tpu.memory_space<smem>>
      %527 = vector.extract_strided_slice %495 {offsets = [6, 0], sizes = [16, 16], strides = [1, 1]} : vector<22x16xf32> to vector<16x16xf32>
      %528 = vector.broadcast %526 : f32 to vector<16x16xf32>
      %529 = arith.mulf %528, %527 : vector<16x16xf32>
      %530 = arith.addf %525, %529 : vector<16x16xf32>
      %531 = vector.extract_strided_slice %314 {offsets = [0, 6], sizes = [22, 16], strides = [1, 1]} : vector<22x22xf32> to vector<22x16xf32>
      %c55 = arith.constant 55 : index
      %532 = memref.load %arg3[%c55] : memref<98xf32, #tpu.memory_space<smem>>
      %533 = vector.extract_strided_slice %531 {offsets = [0, 0], sizes = [16, 16], strides = [1, 1]} : vector<22x16xf32> to vector<16x16xf32>
      %534 = vector.broadcast %532 : f32 to vector<16x16xf32>
      %535 = arith.mulf %534, %533 : vector<16x16xf32>
      %536 = arith.addf %530, %535 : vector<16x16xf32>
      %c62 = arith.constant 62 : index
      %537 = memref.load %arg3[%c62] : memref<98xf32, #tpu.memory_space<smem>>
      %538 = vector.extract_strided_slice %531 {offsets = [1, 0], sizes = [16, 16], strides = [1, 1]} : vector<22x16xf32> to vector<16x16xf32>
      %539 = vector.broadcast %537 : f32 to vector<16x16xf32>
      %540 = arith.mulf %539, %538 : vector<16x16xf32>
      %541 = arith.addf %536, %540 : vector<16x16xf32>
      %c69 = arith.constant 69 : index
      %542 = memref.load %arg3[%c69] : memref<98xf32, #tpu.memory_space<smem>>
      %543 = vector.extract_strided_slice %531 {offsets = [2, 0], sizes = [16, 16], strides = [1, 1]} : vector<22x16xf32> to vector<16x16xf32>
      %544 = vector.broadcast %542 : f32 to vector<16x16xf32>
      %545 = arith.mulf %544, %543 : vector<16x16xf32>
      %546 = arith.addf %541, %545 : vector<16x16xf32>
      %c76 = arith.constant 76 : index
      %547 = memref.load %arg3[%c76] : memref<98xf32, #tpu.memory_space<smem>>
      %548 = vector.extract_strided_slice %531 {offsets = [3, 0], sizes = [16, 16], strides = [1, 1]} : vector<22x16xf32> to vector<16x16xf32>
      %549 = vector.broadcast %547 : f32 to vector<16x16xf32>
      %550 = arith.mulf %549, %548 : vector<16x16xf32>
      %551 = arith.addf %546, %550 : vector<16x16xf32>
      %c83 = arith.constant 83 : index
      %552 = memref.load %arg3[%c83] : memref<98xf32, #tpu.memory_space<smem>>
      %553 = vector.extract_strided_slice %531 {offsets = [4, 0], sizes = [16, 16], strides = [1, 1]} : vector<22x16xf32> to vector<16x16xf32>
      %554 = vector.broadcast %552 : f32 to vector<16x16xf32>
      %555 = arith.mulf %554, %553 : vector<16x16xf32>
      %556 = arith.addf %551, %555 : vector<16x16xf32>
      %c90 = arith.constant 90 : index
      %557 = memref.load %arg3[%c90] : memref<98xf32, #tpu.memory_space<smem>>
      %558 = vector.extract_strided_slice %531 {offsets = [5, 0], sizes = [16, 16], strides = [1, 1]} : vector<22x16xf32> to vector<16x16xf32>
      %559 = vector.broadcast %557 : f32 to vector<16x16xf32>
      %560 = arith.mulf %559, %558 : vector<16x16xf32>
      %561 = arith.addf %556, %560 : vector<16x16xf32>
      %c97 = arith.constant 97 : index
      %562 = memref.load %arg3[%c97] : memref<98xf32, #tpu.memory_space<smem>>
      %563 = vector.extract_strided_slice %531 {offsets = [6, 0], sizes = [16, 16], strides = [1, 1]} : vector<22x16xf32> to vector<16x16xf32>
      %564 = vector.broadcast %562 : f32 to vector<16x16xf32>
      %565 = arith.mulf %564, %563 : vector<16x16xf32>
      %566 = arith.addf %561, %565 : vector<16x16xf32>
      %567 = arith.negf %566 : vector<16x16xf32>
      %568 = math.exp %567 : vector<16x16xf32>
      %cst_66 = arith.constant 1.000000e+00 : f32
      %569 = vector.broadcast %cst_66 : f32 to vector<16x16xf32>
      %570 = arith.addf %569, %568 : vector<16x16xf32>
      %571 = arith.divf %569, %570 : vector<16x16xf32>
      %c0_67 = arith.constant 0 : index
      %c0_68 = arith.constant 0 : index
      %c0_69 = arith.constant 0 : index
      %572 = vector.load %arg4[%c0_67, %c0_68, %c0_69] : memref<1x16x16xf32, #tpu.memory_space<vmem>>, vector<1x16x16xf32>
      %573 = vector.shape_cast %572 : vector<1x16x16xf32> to vector<16x16xf32>
      %574 = vector.shape_cast %571 : vector<16x16xf32> to vector<1x16x16xf32>
      tpu.vector_store %arg4[%c0_67, %c0_68, %c0_69], %574 {strides = array<i32>} : memref<1x16x16xf32, #tpu.memory_space<vmem>>, vector<1x16x16xf32>,
    } else {
    }
    return
  }
  func.func @transform_0(%arg0: i32, %arg1: i32) -> (i32, i32, i32, i32) {
    %c0_i32 = arith.constant 0 : i32
    %c0_i32_0 = arith.constant 0 : i32
    %c0_i32_1 = arith.constant 0 : i32
    return %arg0, %arg1, %c0_i32, %c0_i32_0 : i32, i32, i32, i32
  }
  func.func @transform_1(%arg0: i32, %arg1: i32) -> i32 {
    %c0_i32 = arith.constant 0 : i32
    %c0_i32_0 = arith.constant 0 : i32
    return %c0_i32 : i32
  }
  func.func @transform_2(%arg0: i32, %arg1: i32) -> (i32, i32, i32) {
    %c0_i32 = arith.constant 0 : i32
    %c0_i32_0 = arith.constant 0 : i32
    %c0_i32_1 = arith.constant 0 : i32
    return %arg0, %c0_i32, %c0_i32_0 : i32, i32, i32
  }
}

</mosaic_0001>

<llo_original>
// kernel: tpu_custom_call.1
$region0: #{tpu_custom_call.1}
  #allocation0 [shape = 'u32[]', space=smem, size = 0x4, offset = 0x4, fixed_abs, tag = 'smem constant byte address 0x4 - core index']
  #allocation1 [shape = 'u32[144,128]{1,0:T(1,128)}', space=vmem, size = 0x12000, scoped, tag = 'internal scratch']
  #allocation2 [shape = 'f32[16,16]{1,0:T(8,128)}', space=vmem, size = 0x2000, scoped, tag = 'scratch operand']
  #allocation3 [shape = 'f32[16,16]{1,0:T(8,128)}', space=vmem, size = 0x2000, scoped, tag = 'scratch operand']
  #allocation4 [shape = 'f32[2,22,22]{2,1,0:T(8,128)}', space=vmem, size = 0x6000, scoped, tag = 'scratch operand']
  %s0 = inlined_call_operand.hbm [shape: f32[2,4,16,16], index: 0, kind: input, shape index: {}]
  %s1 = inlined_call_operand.vmem [shape: f32[98], index: 1, kind: input, shape index: {}]
  %s2 = inlined_call_operand.hbm [shape: f32[2,16,16], index: 2, kind: output, shape index: {}]
  %s3 = sld [smem:[#allocation0]]
  $region57: #{tpu_custom_call.1} parent=0
    _
  %s5 = ssub.s32 1, %s3
  %s6 = scalar_select 0, %s5, %s3
  $region1: #{tpu_custom_call.1} parent=0
    #allocation5 [shape = 'u8[65536]{0}', space=vmem, size = 0x10000, scoped, tag = 'input window, operand 0']
    #allocation6 [shape = 's32[2]{0}', space=sflag, size = 0x8, scoped, tag = 'scoped memory for tpu_custom_call.1']
    #allocation7 [shape = 's32[2]{0}', space=sflag, size = 0x8, scoped, tag = 'scoped memory for tpu_custom_call.1']
    #allocation8 [shape = 's32[2]{0}', space=sflag, size = 0x8, scoped, tag = 'scoped memory for tpu_custom_call.1']
    #allocation9 [shape = 'u8[512]{0}', space=smem, size = 0x200, scoped, tag = 'input window, operand 1, single buffered']
    #allocation10 [shape = 'u8[16384]{0}', space=vmem, size = 0x4000, scoped, tag = 'output window, operand 0']
    %7 = vsyncpa [#allocation6], 0
    %s8 = scalar_lea.sflag [#allocation6], 1
    %9 = vsyncpa %s8, 0
    %10 = vsyncpa [#allocation8], 0
    %11 = vsyncpa [#allocation7], 0
    %s12 = scalar_lea.sflag [#allocation7], 1
    %13 = vsyncpa %s12, 0
    loop: start=0, step=1, limit=4
    $region2: #{tpu_custom_call.1} parent=1 // loop_pre_header
      _
    $region3: #{tpu_custom_call.1} parent=1 // loop_header
      %s15 = sphi 0, %s19
      %p16 = scmp.ge.s32.totalorder %s15, 4
      %s22 = sphi 0, %s34
      %s23 = sphi 0, %s30
      %s24 = sphi 0, %s22
      %s25 = sphi 0, %s23
      %s26 = sphi 0, %s24
      %s27 = sphi 0, %s25
      %s39 = sphi 0, %s41
      %s42 = sphi 0, %s39
      %s43 = sphi 0, %s42
      %s59 = sphi 0, %s43
      %s63 = sphi 0, %s63
      %s65 = sphi 0, %s63
      %s66 = sphi 0, %s65
      %s80 = sphi 0, %s66
      %s86 = sphi 0, %s88
      %s89 = sphi 0, %s86
      %s90 = sphi 0, %s89
      %s106 = sphi 0, %s90
    $region4: #{tpu_custom_call.1} parent=1 // loop_header_branch
      %18 = sbr.rel (%p16) target = $region8
    $region5: #{tpu_custom_call.1} parent=1 // loop_body
      %s20 = ssub.s32 %s15, 1
      %s21 = ssub.s32 %s15, 2
      %s28 = sadd.s32 1, %s23
      %p29 = scmp.ge.s32.totalorder %s28, 1
      %s30 = scalar_select %p29, 0, %s28
      %s31 = sadd.s32 1, %s22
      %s32 = scalar_select %p29, %s31, %s22
      %p33 = scmp.ge.s32.totalorder %s32, 2
      %s34 = scalar_select %p33, 0, %s32
      %s35 = ssub.s32 %s22, %s34
      %s36 = ssub.s32 %s23, %s30
      %s37 = sor.u32 %s35, %s36
      %p38 = scmp.eq.s32.totalorder %s37, 0
      %s40 = sadd.s32 %s39, 1
      %s41 = scalar_select %p38, %s39, %s40
      %p44 = pneg %p38
      %p45 = scmp.eq.s32.totalorder %s15, 1
      %p46 = por %p44, %p45
      %p47 = scmp.ne.s32.totalorder %s39, %s42
      %p48 = scmp.eq.s32.totalorder %s15, 0
      %p49 = por %p47, %p48
      %p50 = scmp.ne.s32.totalorder %s39, %s42
      %p51 = scmp.eq.s32.totalorder %s20, 1
      %p52 = por %p50, %p51
      %p53 = scmp.ne.s32.totalorder %s42, %s43
      %p54 = scmp.eq.s32.totalorder %s20, 0
      %p55 = por %p53, %p54
      %p56 = scmp.ne.s32.totalorder %s42, %s43
      %p57 = scmp.eq.s32.totalorder %s21, 1
      %p58 = por %p56, %p57
      %p60 = scmp.ne.s32.totalorder %s43, %s59
      %p61 = scmp.eq.s32.totalorder %s21, 0
      %p62 = por %p60, %p61
      %s64 = sadd.s32 %s63, 1
      %p67 = scmp.eq.s32.totalorder %s15, 1
      %p68 = scmp.ne.s32.totalorder %s63, %s65
      %p69 = scmp.eq.s32.totalorder %s15, 0
      %p70 = por %p68, %p69
      %p71 = scmp.ne.s32.totalorder %s63, %s65
      %p72 = scmp.eq.s32.totalorder %s20, 1
      %p73 = por %p71, %p72
      %p74 = scmp.ne.s32.totalorder %s65, %s66
      %p75 = scmp.eq.s32.totalorder %s20, 0
      %p76 = por %p74, %p75
      %p77 = scmp.ne.s32.totalorder %s65, %s66
      %p78 = scmp.eq.s32.totalorder %s21, 1
      %p79 = por %p77, %p78
      %p81 = scmp.ne.s32.totalorder %s66, %s80
      %p82 = scmp.eq.s32.totalorder %s21, 0
      %p83 = por %p81, %p82
      %s84 = ssub.s32 %s22, %s34
      %p85 = scmp.eq.s32.totalorder %s84, 0
      %s87 = sadd.s32 %s86, 1
      %s88 = scalar_select %p85, %s86, %s87
      %p91 = pneg %p85
      %p92 = scmp.eq.s32.totalorder %s15, 1
      %p93 = por %p91, %p92
      %p94 = scmp.ne.s32.totalorder %s86, %s89
      %p95 = scmp.eq.s32.totalorder %s15, 0
      %p96 = por %p94, %p95
      %p97 = scmp.ne.s32.totalorder %s86, %s89
      %p98 = scmp.eq.s32.totalorder %s20, 1
      %p99 = por %p97, %p98
      %p100 = scmp.ne.s32.totalorder %s89, %s90
      %p101 = scmp.eq.s32.totalorder %s20, 0
      %p102 = por %p100, %p101
      %p103 = scmp.ne.s32.totalorder %s89, %s90
      %p104 = scmp.eq.s32.totalorder %s21, 1
      %p105 = por %p103, %p104
      %p107 = scmp.ne.s32.totalorder %s90, %s106
      %p108 = scmp.eq.s32.totalorder %s21, 0
      %p109 = por %p107, %p108
      %p110 = scmp.le.s32.totalorder 1, %s15
      %p111 = scmp.lt.s32.totalorder %s15, 3
      %p112 = pnand %p110, %p111
      %p113 = pneg %p112
      // Predicated region
      $region9: #{tpu_custom_call.1} parent=5 // pred_check
        _
      $region10: #{tpu_custom_call.1} parent=5 // pred_check_branch
        %115 = sbr.rel (%p112) target = $region12
      $region11: #{tpu_custom_call.1} parent=5 // pred_region
        %s116 = ssub.s32 %s15, 1
        // Predicated region
        $region13: #{tpu_custom_call.1} parent=11 // pred_check
          %p117 = pneg %p76
        $region14: #{tpu_custom_call.1} parent=11 // pred_check_branch
          %119 = sbr.rel (%p117) target = $region16
        $region15: #{tpu_custom_call.1} parent=11 // pred_region
          %s121 = ssub.s32 16, 16
          %122 = vsyncadd [#allocation8], %s121
          %s124 = sshll.u32 %s1, 4
          %s125 = int_to_ptr.vmem [resolvable:$true] %s124
          %127 = dma.vmem_to_smem %s125, 16, [#allocation9], [#allocation8]
        $region16: #{tpu_custom_call.1} parent=11 // pred_fallthru
          _
      $region12: #{tpu_custom_call.1} parent=5 // pred_fallthru
        _
      %p128 = scmp.lt.s32.totalorder %s15, 2
      // Predicated region
      $region17: #{tpu_custom_call.1} parent=5 // pred_check
        %p129 = pneg %p128
      $region18: #{tpu_custom_call.1} parent=5 // pred_check_branch
        %131 = sbr.rel (%p129) target = $region20
      $region19: #{tpu_custom_call.1} parent=5 // pred_region
        // Predicated region
        $region21: #{tpu_custom_call.1} parent=19 // pred_check
          %p132 = pneg %p49
        $region22: #{tpu_custom_call.1} parent=19 // pred_check_branch
          %134 = sbr.rel (%p132) target = $region24
        $region23: #{tpu_custom_call.1} parent=19 // pred_region
          %s135 = sand.u32 %s39, 1
          %s136 = scalar_lea.sflag [#allocation6], %s135
          %s137 = sand.u32 %s39, 1
          %s138 = smul.addr %s137, 64
          %s139 = scalar_lea.vmem [#allocation5], %s138
          %s140 = smul.u32 4, %s23
          %s142 = ssub.s32 1024, 1024
          %143 = vsyncadd %s136, %s142
          %s144 = smul.addr %s140, 2
          %s145 = smul.addr %s22, 8
          %s146 = sadd.s32 %s144, %s145
          %s147 = smul.addr %s146, 128
          %s148 = scalar_lea.hbm %s0, %s147
          %s149 = sshll.u32 %s139, 4
          %s150 = int_to_ptr.vmem [resolvable:$true] %s149
          %155 = dma.hbm_to_vmem [thread:$0]  %s148, 1024, %s150, %s136, 128, 128, 8
        $region24: #{tpu_custom_call.1} parent=19 // pred_fallthru
          _
      $region20: #{tpu_custom_call.1} parent=5 // pred_fallthru
        _
      %p156 = scmp.le.s32.totalorder 1, %s15
      %p157 = scmp.lt.s32.totalorder %s15, 3
      %p158 = pnand %p156, %p157
      %p159 = pneg %p158
      // Predicated region
      $region25: #{tpu_custom_call.1} parent=5 // pred_check
        _
      $region26: #{tpu_custom_call.1} parent=5 // pred_check_branch
        %161 = sbr.rel (%p158) target = $region28
      $region27: #{tpu_custom_call.1} parent=5 // pred_region
        %s162 = ssub.s32 %s15, 1
        %s163 = sand.u32 %s42, 1
        %s164 = scalar_lea.sflag [#allocation6], %s163
        %s165 = sand.u32 %s42, 1
        %s166 = smul.addr %s165, 64
        %s167 = scalar_lea.vmem [#allocation5], %s166
        // Predicated region
        $region29: #{tpu_custom_call.1} parent=27 // pred_check
          %p168 = pneg %p55
        $region30: #{tpu_custom_call.1} parent=27 // pred_check_branch
          %170 = sbr.rel (%p168) target = $region32
        $region31: #{tpu_custom_call.1} parent=27 // pred_region
          %171 = dma.done %s164, 1024
        $region32: #{tpu_custom_call.1} parent=27 // pred_fallthru
          _
        // Predicated region
        $region33: #{tpu_custom_call.1} parent=27 // pred_check
          %p172 = pneg %p76
        $region34: #{tpu_custom_call.1} parent=27 // pred_check_branch
          %174 = sbr.rel (%p172) target = $region36
        $region35: #{tpu_custom_call.1} parent=27 // pred_region
          %175 = dma.done [#allocation8], 16
        $region36: #{tpu_custom_call.1} parent=27 // pred_fallthru
          _
        %176 = sfence
        %s177 = sand.u32 %s42, 1
        %s178 = scalar_lea.sflag [#allocation6], %s177
        %s179 = sand.u32 %s42, 1
        %s180 = smul.addr %s179, 64
        %s181 = scalar_lea.vmem [#allocation5], %s180
        %p182 = pneg %p55
        %p183 = pneg %p52
        %p184 = pneg %p76
        %p185 = pneg %p73
        %p186 = pneg %p102
        %p187 = pneg %p99
        %s188 = sand.u32 %s89, 1
        %s189 = scalar_lea.sflag [#allocation7], %s188
        %s190 = sand.u32 %s89, 1
        %s191 = smul.addr %s190, 16
        %s192 = scalar_lea.vmem [#allocation10], %s191
        %s193 = smul.u32 4, %s25
        %v194 = vld [vmem:[%s167] sm:$0xff]
        %v195 = vld [vmem:[%s167 + $0x8] sm:$0xff]
        %v196 = vld [vmem:[%s167 + $0x10] sm:$0xff]
        %v197 = vld [vmem:[%s167 + $0x18] sm:$0xff]
        %v198 = vld [vmem:[%s167 + $0x20] sm:$0xff]
        %v199 = vld [vmem:[%s167 + $0x28] sm:$0xff]
        %v200 = vld [vmem:[%s167 + $0x30] sm:$0xff]
        %v201 = vld [vmem:[%s167 + $0x38] sm:$0xff]
        %vm202 = vcmask 130048
        %v203 = vsel %vm202, %v194, 0.0
        %v204 = vsel %vm202, %v196, 0.0
        %v205 = vadd.f32 %v203, %v204
        %v206 = vsel %vm202, %v198, 0.0
        %v207 = vadd.f32 %v205, %v206
        %v208 = vsel %vm202, %v200, 0.0
        %v209 = vadd.f32 %v207, %v208
        %v210 = vsel %vm202, %v195, 0.0
        %v211 = vsel %vm202, %v197, 0.0
        %v212 = vadd.f32 %v210, %v211
        %v213 = vsel %vm202, %v199, 0.0
        %v214 = vadd.f32 %v212, %v213
        %v215 = vsel %vm202, %v201, 0.0
        %v216 = vadd.f32 %v214, %v215
        %v217 = vsel %vm202, %v194, -inf
        %v218 = vsel %vm202, %v196, -inf
        %v219 = vsel %vm202, %v198, -inf
        %v220 = vmax.f32 %v217, %v219
        %v221 = vsel %vm202, %v200, -inf
        %v222 = vmax.f32 %v218, %v221
        %v223 = vmax.f32 %v220, %v222
        %v224 = vsel %vm202, %v195, -inf
        %v225 = vsel %vm202, %v197, -inf
        %v226 = vsel %vm202, %v199, -inf
        %v227 = vmax.f32 %v224, %v226
        %v228 = vsel %vm202, %v201, -inf
        %v229 = vmax.f32 %v225, %v228
        %v230 = vmax.f32 %v227, %v229
        %p231 = scmp.eq.s32.totalorder %s25, 0
        // Predicated region
        $region37: #{tpu_custom_call.1} parent=27 // pred_check
          %p232 = pneg %p231
        $region38: #{tpu_custom_call.1} parent=27 // pred_check_branch
          %234 = sbr.rel (%p232) target = $region40
        $region39: #{tpu_custom_call.1} parent=27 // pred_region
          %235 = vst.msk [vmem:[#allocation2] sm:$0xff] %vm202, 0.0
          %236 = vst.msk [vmem:[#allocation2 + $0x8] sm:$0xff] %vm202, 0.0
          %237 = vst.msk [vmem:[#allocation3] sm:$0xff] %vm202, -inf
          %238 = vst.msk [vmem:[#allocation3 + $0x8] sm:$0xff] %vm202, -inf
        $region40: #{tpu_custom_call.1} parent=27 // pred_fallthru
          _
        %v239 = vld [vmem:[#allocation2] sm:$0xff]
        %v240 = vld [vmem:[#allocation2 + $0x8] sm:$0xff]
        %v241 = vadd.f32 %v239, %v209
        %v242 = vadd.f32 %v240, %v216
        %243 = vst.msk [vmem:[#allocation2] sm:$0xff] %vm202, %v241
        %244 = vst.msk [vmem:[#allocation2 + $0x8] sm:$0xff] %vm202, %v242
        %v245 = vld [vmem:[#allocation3] sm:$0xff]
        %v246 = vld [vmem:[#allocation3 + $0x8] sm:$0xff]
        %v247 = vmax.f32 %v245, %v223
        %v248 = vmax.f32 %v246, %v230
        %249 = vst.msk [vmem:[#allocation3] sm:$0xff] %vm202, %v247
        %250 = vst.msk [vmem:[#allocation3 + $0x8] sm:$0xff] %vm202, %v248
        // Predicated region
        $region41: #{tpu_custom_call.1} parent=27 // pred_check
          %p251 = pneg %p231
        $region42: #{tpu_custom_call.1} parent=27 // pred_check_branch
          %253 = sbr.rel (%p251) target = $region44
        $region43: #{tpu_custom_call.1} parent=27 // pred_region
          %vm254 = vcmask 174080
          %255 = vst.msk [vmem:[#allocation4] sm:$0x7] %vm254, 0.0
          %256 = vst.msk [vmem:[#allocation4 + $0x13] sm:$0x7] %vm254, 0.0
          %vm257 = vcmask 23552
          %258 = vst.msk [vmem:[#allocation4 + $0x3] sm:$0xff] %vm257, 0.0
          %259 = vst.msk [vmem:[#allocation4 + $0xb] sm:$0xff] %vm257, 0.0
          %vm260 = vcmask 179352
          %261 = vst.msk [vmem:[#allocation4 + $0x3] sm:$0xff] %vm260, 0.0
          %262 = vst.msk [vmem:[#allocation4 + $0xb] sm:$0xff] %vm260, 0.0
          %s263 = scalar_lea.vmem [#allocation4], 24
          %264 = vst.msk [vmem:[%s263] sm:$0x7] %vm254, 0.0
          %265 = vst.msk [vmem:[%s263 + $0x13] sm:$0x7] %vm254, 0.0
          %266 = vst.msk [vmem:[%s263 + $0x3] sm:$0xff] %vm257, 0.0
          %267 = vst.msk [vmem:[%s263 + $0xb] sm:$0xff] %vm257, 0.0
          %268 = vst.msk [vmem:[%s263 + $0x3] sm:$0xff] %vm260, 0.0
          %269 = vst.msk [vmem:[%s263 + $0xb] sm:$0xff] %vm260, 0.0
          %v270 = vld [vmem:[#allocation2] sm:$0xff]
          %v271 = vld [vmem:[#allocation2 + $0x8] sm:$0xff]
          %v272 = vmul.f32 %v270, 0.25
          %v273 = vmul.f32 %v271, 0.25
          %276 = vrot.lane.b32.xlu0 %v272, 3
          %v277 = vpop.permute.xlu0 %276
          %278 = vrot.lane.b32.xlu0 %v273, 3
          %v279 = vpop.permute.xlu0 %278
          %vm282 = vcmask 154648
          %283 = vst.msk [vmem:[#allocation4 + $0x3] sm:$0xff] %vm282, %v277
          %284 = vst.msk [vmem:[#allocation4 + $0xb] sm:$0xff] %vm282, %v279
          %v285 = vld [vmem:[#allocation3] sm:$0xff]
          %v286 = vld [vmem:[#allocation3 + $0x8] sm:$0xff]
          %289 = vrot.lane.b32.xlu0 %v285, 3
          %v290 = vpop.permute.xlu0 %289
          %291 = vrot.lane.b32.xlu0 %v286, 3
          %v292 = vpop.permute.xlu0 %291
          %295 = vst.msk [vmem:[%s263 + $0x3] sm:$0xff] %vm282, %v290
          %296 = vst.msk [vmem:[%s263 + $0xb] sm:$0xff] %vm282, %v292
          %v297 = vld [vmem:[#allocation4] sm:$0xff]
          %v298 = vld [vmem:[#allocation4 + $0x8] sm:$0xff]
          %v299 = vld [vmem:[#allocation4 + $0x10] sm:$0x3f]
          %s300 = sld [smem:[#allocation9]]
          %v301 = vstv %s300
          %v302 = vmul.f32 %v301, %v297
          %v303 = vmul.f32 %v301, %v298
          %v304 = vadd.f32 %v302, 0.0
          %v305 = vadd.f32 %v303, 0.0
          %s306 = sld [smem:[#allocation9 + $0x7]]
          %v307 = vstv %s306
          %v308 = vmul.f32 %v307, %v297
          %v309 = vmul.f32 %v307, %v298
          %v310 = vmul.f32 %v307, %v299
          %vm314 = vcmask 1046528
          %v315 = vrot.slane %v308, 1
          %v316 = vrot.slane %v309, 1
          %v317 = vsel %vm314, %v315, %v316
          %v318 = vrot.slane %v310, 1
          %v319 = vsel %vm314, %v316, %v318
          %v322 = vadd.f32 %v304, %v317
          %v323 = vadd.f32 %v305, %v319
          %s324 = sld [smem:[#allocation9 + $0xe]]
          %v325 = vstv %s324
          %v326 = vmul.f32 %v325, %v297
          %v327 = vmul.f32 %v325, %v298
          %v328 = vmul.f32 %v325, %v299
          %vm332 = vcmask 1045504
          %v333 = vrot.slane %v326, 2
          %v334 = vrot.slane %v327, 2
          %v335 = vsel %vm332, %v333, %v334
          %v336 = vrot.slane %v328, 2
          %v337 = vsel %vm332, %v334, %v336
          %v340 = vadd.f32 %v322, %v335
          %v341 = vadd.f32 %v323, %v337
          %s342 = sld [smem:[#allocation9 + $0x15]]
          %v343 = vstv %s342
          %v344 = vmul.f32 %v343, %v297
          %v345 = vmul.f32 %v343, %v298
          %v346 = vmul.f32 %v343, %v299
          %vm350 = vcmask 1044480
          %v351 = vrot.slane %v344, 3
          %v352 = vrot.slane %v345, 3
          %v353 = vsel %vm350, %v351, %v352
          %v354 = vrot.slane %v346, 3
          %v355 = vsel %vm350, %v352, %v354
          %v358 = vadd.f32 %v340, %v353
          %v359 = vadd.f32 %v341, %v355
          %s360 = sld [smem:[#allocation9 + $0x1c]]
          %v361 = vstv %s360
          %v362 = vmul.f32 %v361, %v297
          %v363 = vmul.f32 %v361, %v298
          %v364 = vmul.f32 %v361, %v299
          %vm368 = vcmask 1043456
          %v369 = vrot.slane %v362, 4
          %v370 = vrot.slane %v363, 4
          %v371 = vsel %vm368, %v369, %v370
          %v372 = vrot.slane %v364, 4
          %v373 = vsel %vm368, %v370, %v372
          %v376 = vadd.f32 %v358, %v371
          %v377 = vadd.f32 %v359, %v373
          %s378 = sld [smem:[#allocation9 + $0x23]]
          %v379 = vstv %s378
          %v380 = vmul.f32 %v379, %v297
          %v381 = vmul.f32 %v379, %v298
          %v382 = vmul.f32 %v379, %v299
          %vm386 = vcmask 1042432
          %v387 = vrot.slane %v380, 5
          %v388 = vrot.slane %v381, 5
          %v389 = vsel %vm386, %v387, %v388
          %v390 = vrot.slane %v382, 5
          %v391 = vsel %vm386, %v388, %v390
          %v394 = vadd.f32 %v376, %v389
          %v395 = vadd.f32 %v377, %v391
          %s396 = sld [smem:[#allocation9 + $0x2a]]
          %v397 = vstv %s396
          %v398 = vmul.f32 %v397, %v297
          %v399 = vmul.f32 %v397, %v298
          %v400 = vmul.f32 %v397, %v299
          %vm404 = vcmask 1041408
          %v405 = vrot.slane %v398, 6
          %v406 = vrot.slane %v399, 6
          %v407 = vsel %vm404, %v405, %v406
          %v408 = vrot.slane %v400, 6
          %v409 = vsel %vm404, %v406, %v408
          %v412 = vadd.f32 %v394, %v407
          %v413 = vadd.f32 %v395, %v409
          %s414 = sld [smem:[#allocation9 + $0x1]]
          %v415 = vstv %s414
          %v416 = vmul.f32 %v415, %v297
          %v417 = vmul.f32 %v415, %v298
          %420 = vrot.lane.b32.xlu0 %v416, 127
          %v421 = vpop.permute.xlu0 %420
          %422 = vrot.lane.b32.xlu0 %v417, 127
          %v423 = vpop.permute.xlu0 %422
          %v426 = vadd.f32 %v412, %v421
          %v427 = vadd.f32 %v413, %v423
          %s428 = sld [smem:[#allocation9 + $0x8]]
          %v429 = vstv %s428
          %v430 = vmul.f32 %v429, %v297
          %v431 = vmul.f32 %v429, %v298
          %v432 = vmul.f32 %v429, %v299
          %v436 = vrot.slane %v430, 1
          %v437 = vrot.slane %v431, 1
          %v438 = vsel %vm314, %v436, %v437
          %v439 = vrot.slane %v432, 1
          %v440 = vsel %vm314, %v437, %v439
          %441 = vrot.lane.b32.xlu0 %v438, 127
          %v442 = vpop.permute.xlu0 %441
          %443 = vrot.lane.b32.xlu0 %v440, 127
          %v444 = vpop.permute.xlu0 %443
          %v447 = vadd.f32 %v426, %v442
          %v448 = vadd.f32 %v427, %v444
          %s449 = sld [smem:[#allocation9 + $0xf]]
          %v450 = vstv %s449
          %v451 = vmul.f32 %v450, %v297
          %v452 = vmul.f32 %v450, %v298
          %v453 = vmul.f32 %v450, %v299
          %v457 = vrot.slane %v451, 2
          %v458 = vrot.slane %v452, 2
          %v459 = vsel %vm332, %v457, %v458
          %v460 = vrot.slane %v453, 2
          %v461 = vsel %vm332, %v458, %v460
          %462 = vrot.lane.b32.xlu0 %v459, 127
          %v463 = vpop.permute.xlu0 %462
          %464 = vrot.lane.b32.xlu0 %v461, 127
          %v465 = vpop.permute.xlu0 %464
          %v468 = vadd.f32 %v447, %v463
          %v469 = vadd.f32 %v448, %v465
          %s470 = sld [smem:[#allocation9 + $0x16]]
          %v471 = vstv %s470
          %v472 = vmul.f32 %v471, %v297
          %v473 = vmul.f32 %v471, %v298
          %v474 = vmul.f32 %v471, %v299
          %v478 = vrot.slane %v472, 3
          %v479 = vrot.slane %v473, 3
          %v480 = vsel %vm350, %v478, %v479
          %v481 = vrot.slane %v474, 3
          %v482 = vsel %vm350, %v479, %v481
          %483 = vrot.lane.b32.xlu0 %v480, 127
          %v484 = vpop.permute.xlu0 %483
          %485 = vrot.lane.b32.xlu0 %v482, 127
          %v486 = vpop.permute.xlu0 %485
          %v489 = vadd.f32 %v468, %v484
          %v490 = vadd.f32 %v469, %v486
          %s491 = sld [smem:[#allocation9 + $0x1d]]
          %v492 = vstv %s491
          %v493 = vmul.f32 %v492, %v297
          %v494 = vmul.f32 %v492, %v298
          %v495 = vmul.f32 %v492, %v299
          %v499 = vrot.slane %v493, 4
          %v500 = vrot.slane %v494, 4
          %v501 = vsel %vm368, %v499, %v500
          %v502 = vrot.slane %v495, 4
          %v503 = vsel %vm368, %v500, %v502
          %504 = vrot.lane.b32.xlu0 %v501, 127
          %v505 = vpop.permute.xlu0 %504
          %506 = vrot.lane.b32.xlu0 %v503, 127
          %v507 = vpop.permute.xlu0 %506
          %v510 = vadd.f32 %v489, %v505
          %v511 = vadd.f32 %v490, %v507
          %s512 = sld [smem:[#allocation9 + $0x24]]
          %v513 = vstv %s512
          %v514 = vmul.f32 %v513, %v297
          %v515 = vmul.f32 %v513, %v298
          %v516 = vmul.f32 %v513, %v299
          %v520 = vrot.slane %v514, 5
          %v521 = vrot.slane %v515, 5
          %v522 = vsel %vm386, %v520, %v521
          %v523 = vrot.slane %v516, 5
          %v524 = vsel %vm386, %v521, %v523
          %525 = vrot.lane.b32.xlu0 %v522, 127
          %v526 = vpop.permute.xlu0 %525
          %527 = vrot.lane.b32.xlu0 %v524, 127
          %v528 = vpop.permute.xlu0 %527
          %v531 = vadd.f32 %v510, %v526
          %v532 = vadd.f32 %v511, %v528
          %s533 = sld [smem:[#allocation9 + $0x2b]]
          %v534 = vstv %s533
          %v535 = vmul.f32 %v534, %v297
          %v536 = vmul.f32 %v534, %v298
          %v537 = vmul.f32 %v534, %v299
          %v541 = vrot.slane %v535, 6
          %v542 = vrot.slane %v536, 6
          %v543 = vsel %vm404, %v541, %v542
          %v544 = vrot.slane %v537, 6
          %v545 = vsel %vm404, %v542, %v544
          %546 = vrot.lane.b32.xlu0 %v543, 127
          %v547 = vpop.permute.xlu0 %546
          %548 = vrot.lane.b32.xlu0 %v545, 127
          %v549 = vpop.permute.xlu0 %548
          %v552 = vadd.f32 %v531, %v547
          %v553 = vadd.f32 %v532, %v549
          %s554 = sld [smem:[#allocation9 + $0x2]]
          %v555 = vstv %s554
          %v556 = vmul.f32 %v555, %v297
          %v557 = vmul.f32 %v555, %v298
          %560 = vrot.lane.b32.xlu0 %v556, 126
          %v561 = vpop.permute.xlu0 %560
          %562 = vrot.lane.b32.xlu0 %v557, 126
          %v563 = vpop.permute.xlu0 %562
          %v566 = vadd.f32 %v552, %v561
          %v567 = vadd.f32 %v553, %v563
          %s568 = sld [smem:[#allocation9 + $0x9]]
          %v569 = vstv %s568
          %v570 = vmul.f32 %v569, %v297
          %v571 = vmul.f32 %v569, %v298
          %v572 = vmul.f32 %v569, %v299
          %v576 = vrot.slane %v570, 1
          %v577 = vrot.slane %v571, 1
          %v578 = vsel %vm314, %v576, %v577
          %v579 = vrot.slane %v572, 1
          %v580 = vsel %vm314, %v577, %v579
          %581 = vrot.lane.b32.xlu0 %v578, 126
          %v582 = vpop.permute.xlu0 %581
          %583 = vrot.lane.b32.xlu0 %v580, 126
          %v584 = vpop.permute.xlu0 %583
          %v587 = vadd.f32 %v566, %v582
          %v588 = vadd.f32 %v567, %v584
          %s589 = sld [smem:[#allocation9 + $0x10]]
          %v590 = vstv %s589
          %v591 = vmul.f32 %v590, %v297
          %v592 = vmul.f32 %v590, %v298
          %v593 = vmul.f32 %v590, %v299
          %v597 = vrot.slane %v591, 2
          %v598 = vrot.slane %v592, 2
          %v599 = vsel %vm332, %v597, %v598
          %v600 = vrot.slane %v593, 2
          %v601 = vsel %vm332, %v598, %v600
          %602 = vrot.lane.b32.xlu0 %v599, 126
          %v603 = vpop.permute.xlu0 %602
          %604 = vrot.lane.b32.xlu0 %v601, 126
          %v605 = vpop.permute.xlu0 %604
          %v608 = vadd.f32 %v587, %v603
          %v609 = vadd.f32 %v588, %v605
          %s610 = sld [smem:[#allocation9 + $0x17]]
          %v611 = vstv %s610
          %v612 = vmul.f32 %v611, %v297
          %v613 = vmul.f32 %v611, %v298
          %v614 = vmul.f32 %v611, %v299
          %v618 = vrot.slane %v612, 3
          %v619 = vrot.slane %v613, 3
          %v620 = vsel %vm350, %v618, %v619
          %v621 = vrot.slane %v614, 3
          %v622 = vsel %vm350, %v619, %v621
          %623 = vrot.lane.b32.xlu0 %v620, 126
          %v624 = vpop.permute.xlu0 %623
          %625 = vrot.lane.b32.xlu0 %v622, 126
          %v626 = vpop.permute.xlu0 %625
          %v629 = vadd.f32 %v608, %v624
          %v630 = vadd.f32 %v609, %v626
          %s631 = sld [smem:[#allocation9 + $0x1e]]
          %v632 = vstv %s631
          %v633 = vmul.f32 %v632, %v297
          %v634 = vmul.f32 %v632, %v298
          %v635 = vmul.f32 %v632, %v299
          %v639 = vrot.slane %v633, 4
          %v640 = vrot.slane %v634, 4
          %v641 = vsel %vm368, %v639, %v640
          %v642 = vrot.slane %v635, 4
          %v643 = vsel %vm368, %v640, %v642
          %644 = vrot.lane.b32.xlu0 %v641, 126
          %v645 = vpop.permute.xlu0 %644
          %646 = vrot.lane.b32.xlu0 %v643, 126
          %v647 = vpop.permute.xlu0 %646
          %v650 = vadd.f32 %v629, %v645
          %v651 = vadd.f32 %v630, %v647
          %s652 = sld [smem:[#allocation9 + $0x25]]
          %v653 = vstv %s652
          %v654 = vmul.f32 %v653, %v297
          %v655 = vmul.f32 %v653, %v298
          %v656 = vmul.f32 %v653, %v299
          %v660 = vrot.slane %v654, 5
          %v661 = vrot.slane %v655, 5
          %v662 = vsel %vm386, %v660, %v661
          %v663 = vrot.slane %v656, 5
          %v664 = vsel %vm386, %v661, %v663
          %665 = vrot.lane.b32.xlu0 %v662, 126
          %v666 = vpop.permute.xlu0 %665
          %667 = vrot.lane.b32.xlu0 %v664, 126
          %v668 = vpop.permute.xlu0 %667
          %v671 = vadd.f32 %v650, %v666
          %v672 = vadd.f32 %v651, %v668
          %s673 = sld [smem:[#allocation9 + $0x2c]]
          %v674 = vstv %s673
          %v675 = vmul.f32 %v674, %v297
          %v676 = vmul.f32 %v674, %v298
          %v677 = vmul.f32 %v674, %v299
          %v681 = vrot.slane %v675, 6
          %v682 = vrot.slane %v676, 6
          %v683 = vsel %vm404, %v681, %v682
          %v684 = vrot.slane %v677, 6
          %v685 = vsel %vm404, %v682, %v684
          %686 = vrot.lane.b32.xlu0 %v683, 126
          %v687 = vpop.permute.xlu0 %686
          %688 = vrot.lane.b32.xlu0 %v685, 126
          %v689 = vpop.permute.xlu0 %688
          %v692 = vadd.f32 %v671, %v687
          %v693 = vadd.f32 %v672, %v689
          %s694 = sld [smem:[#allocation9 + $0x3]]
          %v695 = vstv %s694
          %v696 = vmul.f32 %v695, %v297
          %v697 = vmul.f32 %v695, %v298
          %700 = vrot.lane.b32.xlu0 %v696, 125
          %v701 = vpop.permute.xlu0 %700
          %702 = vrot.lane.b32.xlu0 %v697, 125
          %v703 = vpop.permute.xlu0 %702
          %v706 = vadd.f32 %v692, %v701
          %v707 = vadd.f32 %v693, %v703
          %s708 = sld [smem:[#allocation9 + $0xa]]
          %v709 = vstv %s708
          %v710 = vmul.f32 %v709, %v297
          %v711 = vmul.f32 %v709, %v298
          %v712 = vmul.f32 %v709, %v299
          %v716 = vrot.slane %v710, 1
          %v717 = vrot.slane %v711, 1
          %v718 = vsel %vm314, %v716, %v717
          %v719 = vrot.slane %v712, 1
          %v720 = vsel %vm314, %v717, %v719
          %721 = vrot.lane.b32.xlu0 %v718, 125
          %v722 = vpop.permute.xlu0 %721
          %723 = vrot.lane.b32.xlu0 %v720, 125
          %v724 = vpop.permute.xlu0 %723
          %v727 = vadd.f32 %v706, %v722
          %v728 = vadd.f32 %v707, %v724
          %s729 = sld [smem:[#allocation9 + $0x11]]
          %v730 = vstv %s729
          %v731 = vmul.f32 %v730, %v297
          %v732 = vmul.f32 %v730, %v298
          %v733 = vmul.f32 %v730, %v299
          %v737 = vrot.slane %v731, 2
          %v738 = vrot.slane %v732, 2
          %v739 = vsel %vm332, %v737, %v738
          %v740 = vrot.slane %v733, 2
          %v741 = vsel %vm332, %v738, %v740
          %742 = vrot.lane.b32.xlu0 %v739, 125
          %v743 = vpop.permute.xlu0 %742
          %744 = vrot.lane.b32.xlu0 %v741, 125
          %v745 = vpop.permute.xlu0 %744
          %v748 = vadd.f32 %v727, %v743
          %v749 = vadd.f32 %v728, %v745
          %s750 = sld [smem:[#allocation9 + $0x18]]
          %v751 = vstv %s750
          %v752 = vmul.f32 %v751, %v297
          %v753 = vmul.f32 %v751, %v298
          %v754 = vmul.f32 %v751, %v299
          %v758 = vrot.slane %v752, 3
          %v759 = vrot.slane %v753, 3
          %v760 = vsel %vm350, %v758, %v759
          %v761 = vrot.slane %v754, 3
          %v762 = vsel %vm350, %v759, %v761
          %763 = vrot.lane.b32.xlu0 %v760, 125
          %v764 = vpop.permute.xlu0 %763
          %765 = vrot.lane.b32.xlu0 %v762, 125
          %v766 = vpop.permute.xlu0 %765
          %v769 = vadd.f32 %v748, %v764
          %v770 = vadd.f32 %v749, %v766
          %s771 = sld [smem:[#allocation9 + $0x1f]]
          %v772 = vstv %s771
          %v773 = vmul.f32 %v772, %v297
          %v774 = vmul.f32 %v772, %v298
          %v775 = vmul.f32 %v772, %v299
          %v779 = vrot.slane %v773, 4
          %v780 = vrot.slane %v774, 4
          %v781 = vsel %vm368, %v779, %v780
          %v782 = vrot.slane %v775, 4
          %v783 = vsel %vm368, %v780, %v782
          %784 = vrot.lane.b32.xlu0 %v781, 125
          %v785 = vpop.permute.xlu0 %784
          %786 = vrot.lane.b32.xlu0 %v783, 125
          %v787 = vpop.permute.xlu0 %786
          %v790 = vadd.f32 %v769, %v785
          %v791 = vadd.f32 %v770, %v787
          %s792 = sld [smem:[#allocation9 + $0x26]]
          %v793 = vstv %s792
          %v794 = vmul.f32 %v793, %v297
          %v795 = vmul.f32 %v793, %v298
          %v796 = vmul.f32 %v793, %v299
          %v800 = vrot.slane %v794, 5
          %v801 = vrot.slane %v795, 5
          %v802 = vsel %vm386, %v800, %v801
          %v803 = vrot.slane %v796, 5
          %v804 = vsel %vm386, %v801, %v803
          %805 = vrot.lane.b32.xlu0 %v802, 125
          %v806 = vpop.permute.xlu0 %805
          %807 = vrot.lane.b32.xlu0 %v804, 125
          %v808 = vpop.permute.xlu0 %807
          %v811 = vadd.f32 %v790, %v806
          %v812 = vadd.f32 %v791, %v808
          %s813 = sld [smem:[#allocation9 + $0x2d]]
          %v814 = vstv %s813
          %v815 = vmul.f32 %v814, %v297
          %v816 = vmul.f32 %v814, %v298
          %v817 = vmul.f32 %v814, %v299
          %v821 = vrot.slane %v815, 6
          %v822 = vrot.slane %v816, 6
          %v823 = vsel %vm404, %v821, %v822
          %v824 = vrot.slane %v817, 6
          %v825 = vsel %vm404, %v822, %v824
          %826 = vrot.lane.b32.xlu0 %v823, 125
          %v827 = vpop.permute.xlu0 %826
          %828 = vrot.lane.b32.xlu0 %v825, 125
          %v829 = vpop.permute.xlu0 %828
          %v832 = vadd.f32 %v811, %v827
          %v833 = vadd.f32 %v812, %v829
          %s834 = sld [smem:[#allocation9 + $0x4]]
          %v835 = vstv %s834
          %v836 = vmul.f32 %v835, %v297
          %v837 = vmul.f32 %v835, %v298
          %840 = vrot.lane.b32.xlu0 %v836, 124
          %v841 = vpop.permute.xlu0 %840
          %842 = vrot.lane.b32.xlu0 %v837, 124
          %v843 = vpop.permute.xlu0 %842
          %v846 = vadd.f32 %v832, %v841
          %v847 = vadd.f32 %v833, %v843
          %s848 = sld [smem:[#allocation9 + $0xb]]
          %v849 = vstv %s848
          %v850 = vmul.f32 %v849, %v297
          %v851 = vmul.f32 %v849, %v298
          %v852 = vmul.f32 %v849, %v299
          %v856 = vrot.slane %v850, 1
          %v857 = vrot.slane %v851, 1
          %v858 = vsel %vm314, %v856, %v857
          %v859 = vrot.slane %v852, 1
          %v860 = vsel %vm314, %v857, %v859
          %861 = vrot.lane.b32.xlu0 %v858, 124
          %v862 = vpop.permute.xlu0 %861
          %863 = vrot.lane.b32.xlu0 %v860, 124
          %v864 = vpop.permute.xlu0 %863
          %v867 = vadd.f32 %v846, %v862
          %v868 = vadd.f32 %v847, %v864
          %s869 = sld [smem:[#allocation9 + $0x12]]
          %v870 = vstv %s869
          %v871 = vmul.f32 %v870, %v297
          %v872 = vmul.f32 %v870, %v298
          %v873 = vmul.f32 %v870, %v299
          %v877 = vrot.slane %v871, 2
          %v878 = vrot.slane %v872, 2
          %v879 = vsel %vm332, %v877, %v878
          %v880 = vrot.slane %v873, 2
          %v881 = vsel %vm332, %v878, %v880
          %882 = vrot.lane.b32.xlu0 %v879, 124
          %v883 = vpop.permute.xlu0 %882
          %884 = vrot.lane.b32.xlu0 %v881, 124
          %v885 = vpop.permute.xlu0 %884
          %v888 = vadd.f32 %v867, %v883
          %v889 = vadd.f32 %v868, %v885
          %s890 = sld [smem:[#allocation9 + $0x19]]
          %v891 = vstv %s890
          %v892 = vmul.f32 %v891, %v297
          %v893 = vmul.f32 %v891, %v298
          %v894 = vmul.f32 %v891, %v299
          %v898 = vrot.slane %v892, 3
          %v899 = vrot.slane %v893, 3
          %v900 = vsel %vm350, %v898, %v899
          %v901 = vrot.slane %v894, 3
          %v902 = vsel %vm350, %v899, %v901
          %903 = vrot.lane.b32.xlu0 %v900, 124
          %v904 = vpop.permute.xlu0 %903
          %905 = vrot.lane.b32.xlu0 %v902, 124
          %v906 = vpop.permute.xlu0 %905
          %v909 = vadd.f32 %v888, %v904
          %v910 = vadd.f32 %v889, %v906
          %s911 = sld [smem:[#allocation9 + $0x20]]
          %v912 = vstv %s911
          %v913 = vmul.f32 %v912, %v297
          %v914 = vmul.f32 %v912, %v298
          %v915 = vmul.f32 %v912, %v299
          %v919 = vrot.slane %v913, 4
          %v920 = vrot.slane %v914, 4
          %v921 = vsel %vm368, %v919, %v920
          %v922 = vrot.slane %v915, 4
          %v923 = vsel %vm368, %v920, %v922
          %924 = vrot.lane.b32.xlu0 %v921, 124
          %v925 = vpop.permute.xlu0 %924
          %926 = vrot.lane.b32.xlu0 %v923, 124
          %v927 = vpop.permute.xlu0 %926
          %v930 = vadd.f32 %v909, %v925
          %v931 = vadd.f32 %v910, %v927
          %s932 = sld [smem:[#allocation9 + $0x27]]
          %v933 = vstv %s932
          %v934 = vmul.f32 %v933, %v297
          %v935 = vmul.f32 %v933, %v298
          %v936 = vmul.f32 %v933, %v299
          %v940 = vrot.slane %v934, 5
          %v941 = vrot.slane %v935, 5
          %v942 = vsel %vm386, %v940, %v941
          %v943 = vrot.slane %v936, 5
          %v944 = vsel %vm386, %v941, %v943
          %945 = vrot.lane.b32.xlu0 %v942, 124
          %v946 = vpop.permute.xlu0 %945
          %947 = vrot.lane.b32.xlu0 %v944, 124
          %v948 = vpop.permute.xlu0 %947
          %v951 = vadd.f32 %v930, %v946
          %v952 = vadd.f32 %v931, %v948
          %s953 = sld [smem:[#allocation9 + $0x2e]]
          %v954 = vstv %s953
          %v955 = vmul.f32 %v954, %v297
          %v956 = vmul.f32 %v954, %v298
          %v957 = vmul.f32 %v954, %v299
          %v961 = vrot.slane %v955, 6
          %v962 = vrot.slane %v956, 6
          %v963 = vsel %vm404, %v961, %v962
          %v964 = vrot.slane %v957, 6
          %v965 = vsel %vm404, %v962, %v964
          %966 = vrot.lane.b32.xlu0 %v963, 124
          %v967 = vpop.permute.xlu0 %966
          %968 = vrot.lane.b32.xlu0 %v965, 124
          %v969 = vpop.permute.xlu0 %968
          %v972 = vadd.f32 %v951, %v967
          %v973 = vadd.f32 %v952, %v969
          %s974 = sld [smem:[#allocation9 + $0x5]]
          %v975 = vstv %s974
          %v976 = vmul.f32 %v975, %v297
          %v977 = vmul.f32 %v975, %v298
          %980 = vrot.lane.b32.xlu0 %v976, 123
          %v981 = vpop.permute.xlu0 %980
          %982 = vrot.lane.b32.xlu0 %v977, 123
          %v983 = vpop.permute.xlu0 %982
          %v986 = vadd.f32 %v972, %v981
          %v987 = vadd.f32 %v973, %v983
          %s988 = sld [smem:[#allocation9 + $0xc]]
          %v989 = vstv %s988
          %v990 = vmul.f32 %v989, %v297
          %v991 = vmul.f32 %v989, %v298
          %v992 = vmul.f32 %v989, %v299
          %v996 = vrot.slane %v990, 1
          %v997 = vrot.slane %v991, 1
          %v998 = vsel %vm314, %v996, %v997
          %v999 = vrot.slane %v992, 1
          %v1000 = vsel %vm314, %v997, %v999
          %1001 = vrot.lane.b32.xlu0 %v998, 123
          %v1002 = vpop.permute.xlu0 %1001
          %1003 = vrot.lane.b32.xlu0 %v1000, 123
          %v1004 = vpop.permute.xlu0 %1003
          %v1007 = vadd.f32 %v986, %v1002
          %v1008 = vadd.f32 %v987, %v1004
          %s1009 = sld [smem:[#allocation9 + $0x13]]
          %v1010 = vstv %s1009
          %v1011 = vmul.f32 %v1010, %v297
          %v1012 = vmul.f32 %v1010, %v298
          %v1013 = vmul.f32 %v1010, %v299
          %v1017 = vrot.slane %v1011, 2
          %v1018 = vrot.slane %v1012, 2
          %v1019 = vsel %vm332, %v1017, %v1018
          %v1020 = vrot.slane %v1013, 2
          %v1021 = vsel %vm332, %v1018, %v1020
          %1022 = vrot.lane.b32.xlu0 %v1019, 123
          %v1023 = vpop.permute.xlu0 %1022
          %1024 = vrot.lane.b32.xlu0 %v1021, 123
          %v1025 = vpop.permute.xlu0 %1024
          %v1028 = vadd.f32 %v1007, %v1023
          %v1029 = vadd.f32 %v1008, %v1025
          %s1030 = sld [smem:[#allocation9 + $0x1a]]
          %v1031 = vstv %s1030
          %v1032 = vmul.f32 %v1031, %v297
          %v1033 = vmul.f32 %v1031, %v298
          %v1034 = vmul.f32 %v1031, %v299
          %v1038 = vrot.slane %v1032, 3
          %v1039 = vrot.slane %v1033, 3
          %v1040 = vsel %vm350, %v1038, %v1039
          %v1041 = vrot.slane %v1034, 3
          %v1042 = vsel %vm350, %v1039, %v1041
          %1043 = vrot.lane.b32.xlu0 %v1040, 123
          %v1044 = vpop.permute.xlu0 %1043
          %1045 = vrot.lane.b32.xlu0 %v1042, 123
          %v1046 = vpop.permute.xlu0 %1045
          %v1049 = vadd.f32 %v1028, %v1044
          %v1050 = vadd.f32 %v1029, %v1046
          %s1051 = sld [smem:[#allocation9 + $0x21]]
          %v1052 = vstv %s1051
          %v1053 = vmul.f32 %v1052, %v297
          %v1054 = vmul.f32 %v1052, %v298
          %v1055 = vmul.f32 %v1052, %v299
          %v1059 = vrot.slane %v1053, 4
          %v1060 = vrot.slane %v1054, 4
          %v1061 = vsel %vm368, %v1059, %v1060
          %v1062 = vrot.slane %v1055, 4
          %v1063 = vsel %vm368, %v1060, %v1062
          %1064 = vrot.lane.b32.xlu0 %v1061, 123
          %v1065 = vpop.permute.xlu0 %1064
          %1066 = vrot.lane.b32.xlu0 %v1063, 123
          %v1067 = vpop.permute.xlu0 %1066
          %v1070 = vadd.f32 %v1049, %v1065
          %v1071 = vadd.f32 %v1050, %v1067
          %s1072 = sld [smem:[#allocation9 + $0x28]]
          %v1073 = vstv %s1072
          %v1074 = vmul.f32 %v1073, %v297
          %v1075 = vmul.f32 %v1073, %v298
          %v1076 = vmul.f32 %v1073, %v299
          %v1080 = vrot.slane %v1074, 5
          %v1081 = vrot.slane %v1075, 5
          %v1082 = vsel %vm386, %v1080, %v1081
          %v1083 = vrot.slane %v1076, 5
          %v1084 = vsel %vm386, %v1081, %v1083
          %1085 = vrot.lane.b32.xlu0 %v1082, 123
          %v1086 = vpop.permute.xlu0 %1085
          %1087 = vrot.lane.b32.xlu0 %v1084, 123
          %v1088 = vpop.permute.xlu0 %1087
          %v1091 = vadd.f32 %v1070, %v1086
          %v1092 = vadd.f32 %v1071, %v1088
          %s1093 = sld [smem:[#allocation9 + $0x2f]]
          %v1094 = vstv %s1093
          %v1095 = vmul.f32 %v1094, %v297
          %v1096 = vmul.f32 %v1094, %v298
          %v1097 = vmul.f32 %v1094, %v299
          %v1101 = vrot.slane %v1095, 6
          %v1102 = vrot.slane %v1096, 6
          %v1103 = vsel %vm404, %v1101, %v1102
          %v1104 = vrot.slane %v1097, 6
          %v1105 = vsel %vm404, %v1102, %v1104
          %1106 = vrot.lane.b32.xlu0 %v1103, 123
          %v1107 = vpop.permute.xlu0 %1106
          %1108 = vrot.lane.b32.xlu0 %v1105, 123
          %v1109 = vpop.permute.xlu0 %1108
          %v1112 = vadd.f32 %v1091, %v1107
          %v1113 = vadd.f32 %v1092, %v1109
          %s1114 = sld [smem:[#allocation9 + $0x6]]
          %v1115 = vstv %s1114
          %v1116 = vmul.f32 %v1115, %v297
          %v1117 = vmul.f32 %v1115, %v298
          %1120 = vrot.lane.b32.xlu0 %v1116, 122
          %v1121 = vpop.permute.xlu0 %1120
          %1122 = vrot.lane.b32.xlu0 %v1117, 122
          %v1123 = vpop.permute.xlu0 %1122
          %v1126 = vadd.f32 %v1112, %v1121
          %v1127 = vadd.f32 %v1113, %v1123
          %s1128 = sld [smem:[#allocation9 + $0xd]]
          %v1129 = vstv %s1128
          %v1130 = vmul.f32 %v1129, %v297
          %v1131 = vmul.f32 %v1129, %v298
          %v1132 = vmul.f32 %v1129, %v299
          %v1136 = vrot.slane %v1130, 1
          %v1137 = vrot.slane %v1131, 1
          %v1138 = vsel %vm314, %v1136, %v1137
          %v1139 = vrot.slane %v1132, 1
          %v1140 = vsel %vm314, %v1137, %v1139
          %1141 = vrot.lane.b32.xlu0 %v1138, 122
          %v1142 = vpop.permute.xlu0 %1141
          %1143 = vrot.lane.b32.xlu0 %v1140, 122
          %v1144 = vpop.permute.xlu0 %1143
          %v1147 = vadd.f32 %v1126, %v1142
          %v1148 = vadd.f32 %v1127, %v1144
          %s1149 = sld [smem:[#allocation9 + $0x14]]
          %v1150 = vstv %s1149
          %v1151 = vmul.f32 %v1150, %v297
          %v1152 = vmul.f32 %v1150, %v298
          %v1153 = vmul.f32 %v1150, %v299
          %v1157 = vrot.slane %v1151, 2
          %v1158 = vrot.slane %v1152, 2
          %v1159 = vsel %vm332, %v1157, %v1158
          %v1160 = vrot.slane %v1153, 2
          %v1161 = vsel %vm332, %v1158, %v1160
          %1162 = vrot.lane.b32.xlu0 %v1159, 122
          %v1163 = vpop.permute.xlu0 %1162
          %1164 = vrot.lane.b32.xlu0 %v1161, 122
          %v1165 = vpop.permute.xlu0 %1164
          %v1168 = vadd.f32 %v1147, %v1163
          %v1169 = vadd.f32 %v1148, %v1165
          %s1170 = sld [smem:[#allocation9 + $0x1b]]
          %v1171 = vstv %s1170
          %v1172 = vmul.f32 %v1171, %v297
          %v1173 = vmul.f32 %v1171, %v298
          %v1174 = vmul.f32 %v1171, %v299
          %v1178 = vrot.slane %v1172, 3
          %v1179 = vrot.slane %v1173, 3
          %v1180 = vsel %vm350, %v1178, %v1179
          %v1181 = vrot.slane %v1174, 3
          %v1182 = vsel %vm350, %v1179, %v1181
          %1183 = vrot.lane.b32.xlu0 %v1180, 122
          %v1184 = vpop.permute.xlu0 %1183
          %1185 = vrot.lane.b32.xlu0 %v1182, 122
          %v1186 = vpop.permute.xlu0 %1185
          %v1189 = vadd.f32 %v1168, %v1184
          %v1190 = vadd.f32 %v1169, %v1186
          %s1191 = sld [smem:[#allocation9 + $0x22]]
          %v1192 = vstv %s1191
          %v1193 = vmul.f32 %v1192, %v297
          %v1194 = vmul.f32 %v1192, %v298
          %v1195 = vmul.f32 %v1192, %v299
          %v1199 = vrot.slane %v1193, 4
          %v1200 = vrot.slane %v1194, 4
          %v1201 = vsel %vm368, %v1199, %v1200
          %v1202 = vrot.slane %v1195, 4
          %v1203 = vsel %vm368, %v1200, %v1202
          %1204 = vrot.lane.b32.xlu0 %v1201, 122
          %v1205 = vpop.permute.xlu0 %1204
          %1206 = vrot.lane.b32.xlu0 %v1203, 122
          %v1207 = vpop.permute.xlu0 %1206
          %v1210 = vadd.f32 %v1189, %v1205
          %v1211 = vadd.f32 %v1190, %v1207
          %s1212 = sld [smem:[#allocation9 + $0x29]]
          %v1213 = vstv %s1212
          %v1214 = vmul.f32 %v1213, %v297
          %v1215 = vmul.f32 %v1213, %v298
          %v1216 = vmul.f32 %v1213, %v299
          %v1220 = vrot.slane %v1214, 5
          %v1221 = vrot.slane %v1215, 5
          %v1222 = vsel %vm386, %v1220, %v1221
          %v1223 = vrot.slane %v1216, 5
          %v1224 = vsel %vm386, %v1221, %v1223
          %1225 = vrot.lane.b32.xlu0 %v1222, 122
          %v1226 = vpop.permute.xlu0 %1225
          %1227 = vrot.lane.b32.xlu0 %v1224, 122
          %v1228 = vpop.permute.xlu0 %1227
          %v1231 = vadd.f32 %v1210, %v1226
          %v1232 = vadd.f32 %v1211, %v1228
          %s1233 = sld [smem:[#allocation9 + $0x30]]
          %v1234 = vstv %s1233
          %v1235 = vmul.f32 %v1234, %v297
          %v1236 = vmul.f32 %v1234, %v298
          %v1237 = vmul.f32 %v1234, %v299
          %v1241 = vrot.slane %v1235, 6
          %v1242 = vrot.slane %v1236, 6
          %v1243 = vsel %vm404, %v1241, %v1242
          %v1244 = vrot.slane %v1237, 6
          %v1245 = vsel %vm404, %v1242, %v1244
          %1246 = vrot.lane.b32.xlu0 %v1243, 122
          %v1247 = vpop.permute.xlu0 %1246
          %1248 = vrot.lane.b32.xlu0 %v1245, 122
          %v1249 = vpop.permute.xlu0 %1248
          %v1252 = vadd.f32 %v1231, %v1247
          %v1253 = vadd.f32 %v1232, %v1249
          %v1254 = vld [vmem:[%s263] sm:$0xff]
          %v1255 = vld [vmem:[%s263 + $0x8] sm:$0xff]
          %v1256 = vld [vmem:[%s263 + $0x10] sm:$0x3f]
          %s1257 = sld [smem:[#allocation9 + $0x31]]
          %v1258 = vstv %s1257
          %v1259 = vmul.f32 %v1258, %v1254
          %v1260 = vmul.f32 %v1258, %v1255
          %v1261 = vadd.f32 %v1252, %v1259
          %v1262 = vadd.f32 %v1253, %v1260
          %s1263 = sld [smem:[#allocation9 + $0x38]]
          %v1264 = vstv %s1263
          %v1265 = vmul.f32 %v1264, %v1254
          %v1266 = vmul.f32 %v1264, %v1255
          %v1267 = vmul.f32 %v1264, %v1256
          %v1271 = vrot.slane %v1265, 1
          %v1272 = vrot.slane %v1266, 1
          %v1273 = vsel %vm314, %v1271, %v1272
          %v1274 = vrot.slane %v1267, 1
          %v1275 = vsel %vm314, %v1272, %v1274
          %v1278 = vadd.f32 %v1261, %v1273
          %v1279 = vadd.f32 %v1262, %v1275
          %s1280 = sld [smem:[#allocation9 + $0x3f]]
          %v1281 = vstv %s1280
          %v1282 = vmul.f32 %v1281, %v1254
          %v1283 = vmul.f32 %v1281, %v1255
          %v1284 = vmul.f32 %v1281, %v1256
          %v1288 = vrot.slane %v1282, 2
          %v1289 = vrot.slane %v1283, 2
          %v1290 = vsel %vm332, %v1288, %v1289
          %v1291 = vrot.slane %v1284, 2
          %v1292 = vsel %vm332, %v1289, %v1291
          %v1295 = vadd.f32 %v1278, %v1290
          %v1296 = vadd.f32 %v1279, %v1292
          %s1297 = sld [smem:[#allocation9 + $0x46]]
          %v1298 = vstv %s1297
          %v1299 = vmul.f32 %v1298, %v1254
          %v1300 = vmul.f32 %v1298, %v1255
          %v1301 = vmul.f32 %v1298, %v1256
          %v1305 = vrot.slane %v1299, 3
          %v1306 = vrot.slane %v1300, 3
          %v1307 = vsel %vm350, %v1305, %v1306
          %v1308 = vrot.slane %v1301, 3
          %v1309 = vsel %vm350, %v1306, %v1308
          %v1312 = vadd.f32 %v1295, %v1307
          %v1313 = vadd.f32 %v1296, %v1309
          %s1314 = sld [smem:[#allocation9 + $0x4d]]
          %v1315 = vstv %s1314
          %v1316 = vmul.f32 %v1315, %v1254
          %v1317 = vmul.f32 %v1315, %v1255
          %v1318 = vmul.f32 %v1315, %v1256
          %v1322 = vrot.slane %v1316, 4
          %v1323 = vrot.slane %v1317, 4
          %v1324 = vsel %vm368, %v1322, %v1323
          %v1325 = vrot.slane %v1318, 4
          %v1326 = vsel %vm368, %v1323, %v1325
          %v1329 = vadd.f32 %v1312, %v1324
          %v1330 = vadd.f32 %v1313, %v1326
          %s1331 = sld [smem:[#allocation9 + $0x54]]
          %v1332 = vstv %s1331
          %v1333 = vmul.f32 %v1332, %v1254
          %v1334 = vmul.f32 %v1332, %v1255
          %v1335 = vmul.f32 %v1332, %v1256
          %v1339 = vrot.slane %v1333, 5
          %v1340 = vrot.slane %v1334, 5
          %v1341 = vsel %vm386, %v1339, %v1340
          %v1342 = vrot.slane %v1335, 5
          %v1343 = vsel %vm386, %v1340, %v1342
          %v1346 = vadd.f32 %v1329, %v1341
          %v1347 = vadd.f32 %v1330, %v1343
          %s1348 = sld [smem:[#allocation9 + $0x5b]]
          %v1349 = vstv %s1348
          %v1350 = vmul.f32 %v1349, %v1254
          %v1351 = vmul.f32 %v1349, %v1255
          %v1352 = vmul.f32 %v1349, %v1256
          %v1356 = vrot.slane %v1350, 6
          %v1357 = vrot.slane %v1351, 6
          %v1358 = vsel %vm404, %v1356, %v1357
          %v1359 = vrot.slane %v1352, 6
          %v1360 = vsel %vm404, %v1357, %v1359
          %v1363 = vadd.f32 %v1346, %v1358
          %v1364 = vadd.f32 %v1347, %v1360
          %s1365 = sld [smem:[#allocation9 + $0x32]]
          %v1366 = vstv %s1365
          %v1367 = vmul.f32 %v1366, %v1254
          %v1368 = vmul.f32 %v1366, %v1255
          %1371 = vrot.lane.b32.xlu0 %v1367, 127
          %v1372 = vpop.permute.xlu0 %1371
          %1373 = vrot.lane.b32.xlu0 %v1368, 127
          %v1374 = vpop.permute.xlu0 %1373
          %v1377 = vadd.f32 %v1363, %v1372
          %v1378 = vadd.f32 %v1364, %v1374
          %s1379 = sld [smem:[#allocation9 + $0x39]]
          %v1380 = vstv %s1379
          %v1381 = vmul.f32 %v1380, %v1254
          %v1382 = vmul.f32 %v1380, %v1255
          %v1383 = vmul.f32 %v1380, %v1256
          %v1387 = vrot.slane %v1381, 1
          %v1388 = vrot.slane %v1382, 1
          %v1389 = vsel %vm314, %v1387, %v1388
          %v1390 = vrot.slane %v1383, 1
          %v1391 = vsel %vm314, %v1388, %v1390
          %1392 = vrot.lane.b32.xlu0 %v1389, 127
          %v1393 = vpop.permute.xlu0 %1392
          %1394 = vrot.lane.b32.xlu0 %v1391, 127
          %v1395 = vpop.permute.xlu0 %1394
          %v1398 = vadd.f32 %v1377, %v1393
          %v1399 = vadd.f32 %v1378, %v1395
          %s1400 = sld [smem:[#allocation9 + $0x40]]
          %v1401 = vstv %s1400
          %v1402 = vmul.f32 %v1401, %v1254
          %v1403 = vmul.f32 %v1401, %v1255
          %v1404 = vmul.f32 %v1401, %v1256
          %v1408 = vrot.slane %v1402, 2
          %v1409 = vrot.slane %v1403, 2
          %v1410 = vsel %vm332, %v1408, %v1409
          %v1411 = vrot.slane %v1404, 2
          %v1412 = vsel %vm332, %v1409, %v1411
          %1413 = vrot.lane.b32.xlu0 %v1410, 127
          %v1414 = vpop.permute.xlu0 %1413
          %1415 = vrot.lane.b32.xlu0 %v1412, 127
          %v1416 = vpop.permute.xlu0 %1415
          %v1419 = vadd.f32 %v1398, %v1414
          %v1420 = vadd.f32 %v1399, %v1416
          %s1421 = sld [smem:[#allocation9 + $0x47]]
          %v1422 = vstv %s1421
          %v1423 = vmul.f32 %v1422, %v1254
          %v1424 = vmul.f32 %v1422, %v1255
          %v1425 = vmul.f32 %v1422, %v1256
          %v1429 = vrot.slane %v1423, 3
          %v1430 = vrot.slane %v1424, 3
          %v1431 = vsel %vm350, %v1429, %v1430
          %v1432 = vrot.slane %v1425, 3
          %v1433 = vsel %vm350, %v1430, %v1432
          %1434 = vrot.lane.b32.xlu0 %v1431, 127
          %v1435 = vpop.permute.xlu0 %1434
          %1436 = vrot.lane.b32.xlu0 %v1433, 127
          %v1437 = vpop.permute.xlu0 %1436
          %v1440 = vadd.f32 %v1419, %v1435
          %v1441 = vadd.f32 %v1420, %v1437
          %s1442 = sld [smem:[#allocation9 + $0x4e]]
          %v1443 = vstv %s1442
          %v1444 = vmul.f32 %v1443, %v1254
          %v1445 = vmul.f32 %v1443, %v1255
          %v1446 = vmul.f32 %v1443, %v1256
          %v1450 = vrot.slane %v1444, 4
          %v1451 = vrot.slane %v1445, 4
          %v1452 = vsel %vm368, %v1450, %v1451
          %v1453 = vrot.slane %v1446, 4
          %v1454 = vsel %vm368, %v1451, %v1453
          %1455 = vrot.lane.b32.xlu0 %v1452, 127
          %v1456 = vpop.permute.xlu0 %1455
          %1457 = vrot.lane.b32.xlu0 %v1454, 127
          %v1458 = vpop.permute.xlu0 %1457
          %v1461 = vadd.f32 %v1440, %v1456
          %v1462 = vadd.f32 %v1441, %v1458
          %s1463 = sld [smem:[#allocation9 + $0x55]]
          %v1464 = vstv %s1463
          %v1465 = vmul.f32 %v1464, %v1254
          %v1466 = vmul.f32 %v1464, %v1255
          %v1467 = vmul.f32 %v1464, %v1256
          %v1471 = vrot.slane %v1465, 5
          %v1472 = vrot.slane %v1466, 5
          %v1473 = vsel %vm386, %v1471, %v1472
          %v1474 = vrot.slane %v1467, 5
          %v1475 = vsel %vm386, %v1472, %v1474
          %1476 = vrot.lane.b32.xlu0 %v1473, 127
          %v1477 = vpop.permute.xlu0 %1476
          %1478 = vrot.lane.b32.xlu0 %v1475, 127
          %v1479 = vpop.permute.xlu0 %1478
          %v1482 = vadd.f32 %v1461, %v1477
          %v1483 = vadd.f32 %v1462, %v1479
          %s1484 = sld [smem:[#allocation9 + $0x5c]]
          %v1485 = vstv %s1484
          %v1486 = vmul.f32 %v1485, %v1254
          %v1487 = vmul.f32 %v1485, %v1255
          %v1488 = vmul.f32 %v1485, %v1256
          %v1492 = vrot.slane %v1486, 6
          %v1493 = vrot.slane %v1487, 6
          %v1494 = vsel %vm404, %v1492, %v1493
          %v1495 = vrot.slane %v1488, 6
          %v1496 = vsel %vm404, %v1493, %v1495
          %1497 = vrot.lane.b32.xlu0 %v1494, 127
          %v1498 = vpop.permute.xlu0 %1497
          %1499 = vrot.lane.b32.xlu0 %v1496, 127
          %v1500 = vpop.permute.xlu0 %1499
          %v1503 = vadd.f32 %v1482, %v1498
          %v1504 = vadd.f32 %v1483, %v1500
          %s1505 = sld [smem:[#allocation9 + $0x33]]
          %v1506 = vstv %s1505
          %v1507 = vmul.f32 %v1506, %v1254
          %v1508 = vmul.f32 %v1506, %v1255
          %1511 = vrot.lane.b32.xlu0 %v1507, 126
          %v1512 = vpop.permute.xlu0 %1511
          %1513 = vrot.lane.b32.xlu0 %v1508, 126
          %v1514 = vpop.permute.xlu0 %1513
          %v1517 = vadd.f32 %v1503, %v1512
          %v1518 = vadd.f32 %v1504, %v1514
          %s1519 = sld [smem:[#allocation9 + $0x3a]]
          %v1520 = vstv %s1519
          %v1521 = vmul.f32 %v1520, %v1254
          %v1522 = vmul.f32 %v1520, %v1255
          %v1523 = vmul.f32 %v1520, %v1256
          %v1527 = vrot.slane %v1521, 1
          %v1528 = vrot.slane %v1522, 1
          %v1529 = vsel %vm314, %v1527, %v1528
          %v1530 = vrot.slane %v1523, 1
          %v1531 = vsel %vm314, %v1528, %v1530
          %1532 = vrot.lane.b32.xlu0 %v1529, 126
          %v1533 = vpop.permute.xlu0 %1532
          %1534 = vrot.lane.b32.xlu0 %v1531, 126
          %v1535 = vpop.permute.xlu0 %1534
          %v1538 = vadd.f32 %v1517, %v1533
          %v1539 = vadd.f32 %v1518, %v1535
          %s1540 = sld [smem:[#allocation9 + $0x41]]
          %v1541 = vstv %s1540
          %v1542 = vmul.f32 %v1541, %v1254
          %v1543 = vmul.f32 %v1541, %v1255
          %v1544 = vmul.f32 %v1541, %v1256
          %v1548 = vrot.slane %v1542, 2
          %v1549 = vrot.slane %v1543, 2
          %v1550 = vsel %vm332, %v1548, %v1549
          %v1551 = vrot.slane %v1544, 2
          %v1552 = vsel %vm332, %v1549, %v1551
          %1553 = vrot.lane.b32.xlu0 %v1550, 126
          %v1554 = vpop.permute.xlu0 %1553
          %1555 = vrot.lane.b32.xlu0 %v1552, 126
          %v1556 = vpop.permute.xlu0 %1555
          %v1559 = vadd.f32 %v1538, %v1554
          %v1560 = vadd.f32 %v1539, %v1556
          %s1561 = sld [smem:[#allocation9 + $0x48]]
          %v1562 = vstv %s1561
          %v1563 = vmul.f32 %v1562, %v1254
          %v1564 = vmul.f32 %v1562, %v1255
          %v1565 = vmul.f32 %v1562, %v1256
          %v1569 = vrot.slane %v1563, 3
          %v1570 = vrot.slane %v1564, 3
          %v1571 = vsel %vm350, %v1569, %v1570
          %v1572 = vrot.slane %v1565, 3
          %v1573 = vsel %vm350, %v1570, %v1572
          %1574 = vrot.lane.b32.xlu0 %v1571, 126
          %v1575 = vpop.permute.xlu0 %1574
          %1576 = vrot.lane.b32.xlu0 %v1573, 126
          %v1577 = vpop.permute.xlu0 %1576
          %v1580 = vadd.f32 %v1559, %v1575
          %v1581 = vadd.f32 %v1560, %v1577
          %s1582 = sld [smem:[#allocation9 + $0x4f]]
          %v1583 = vstv %s1582
          %v1584 = vmul.f32 %v1583, %v1254
          %v1585 = vmul.f32 %v1583, %v1255
          %v1586 = vmul.f32 %v1583, %v1256
          %v1590 = vrot.slane %v1584, 4
          %v1591 = vrot.slane %v1585, 4
          %v1592 = vsel %vm368, %v1590, %v1591
          %v1593 = vrot.slane %v1586, 4
          %v1594 = vsel %vm368, %v1591, %v1593
          %1595 = vrot.lane.b32.xlu0 %v1592, 126
          %v1596 = vpop.permute.xlu0 %1595
          %1597 = vrot.lane.b32.xlu0 %v1594, 126
          %v1598 = vpop.permute.xlu0 %1597
          %v1601 = vadd.f32 %v1580, %v1596
          %v1602 = vadd.f32 %v1581, %v1598
          %s1603 = sld [smem:[#allocation9 + $0x56]]
          %v1604 = vstv %s1603
          %v1605 = vmul.f32 %v1604, %v1254
          %v1606 = vmul.f32 %v1604, %v1255
          %v1607 = vmul.f32 %v1604, %v1256
          %v1611 = vrot.slane %v1605, 5
          %v1612 = vrot.slane %v1606, 5
          %v1613 = vsel %vm386, %v1611, %v1612
          %v1614 = vrot.slane %v1607, 5
          %v1615 = vsel %vm386, %v1612, %v1614
          %1616 = vrot.lane.b32.xlu0 %v1613, 126
          %v1617 = vpop.permute.xlu0 %1616
          %1618 = vrot.lane.b32.xlu0 %v1615, 126
          %v1619 = vpop.permute.xlu0 %1618
          %v1622 = vadd.f32 %v1601, %v1617
          %v1623 = vadd.f32 %v1602, %v1619
          %s1624 = sld [smem:[#allocation9 + $0x5d]]
          %v1625 = vstv %s1624
          %v1626 = vmul.f32 %v1625, %v1254
          %v1627 = vmul.f32 %v1625, %v1255
          %v1628 = vmul.f32 %v1625, %v1256
          %v1632 = vrot.slane %v1626, 6
          %v1633 = vrot.slane %v1627, 6
          %v1634 = vsel %vm404, %v1632, %v1633
          %v1635 = vrot.slane %v1628, 6
          %v1636 = vsel %vm404, %v1633, %v1635
          %1637 = vrot.lane.b32.xlu0 %v1634, 126
          %v1638 = vpop.permute.xlu0 %1637
          %1639 = vrot.lane.b32.xlu0 %v1636, 126
          %v1640 = vpop.permute.xlu0 %1639
          %v1643 = vadd.f32 %v1622, %v1638
          %v1644 = vadd.f32 %v1623, %v1640
          %s1645 = sld [smem:[#allocation9 + $0x34]]
          %v1646 = vstv %s1645
          %v1647 = vmul.f32 %v1646, %v1254
          %v1648 = vmul.f32 %v1646, %v1255
          %1651 = vrot.lane.b32.xlu0 %v1647, 125
          %v1652 = vpop.permute.xlu0 %1651
          %1653 = vrot.lane.b32.xlu0 %v1648, 125
          %v1654 = vpop.permute.xlu0 %1653
          %v1657 = vadd.f32 %v1643, %v1652
          %v1658 = vadd.f32 %v1644, %v1654
          %s1659 = sld [smem:[#allocation9 + $0x3b]]
          %v1660 = vstv %s1659
          %v1661 = vmul.f32 %v1660, %v1254
          %v1662 = vmul.f32 %v1660, %v1255
          %v1663 = vmul.f32 %v1660, %v1256
          %v1667 = vrot.slane %v1661, 1
          %v1668 = vrot.slane %v1662, 1
          %v1669 = vsel %vm314, %v1667, %v1668
          %v1670 = vrot.slane %v1663, 1
          %v1671 = vsel %vm314, %v1668, %v1670
          %1672 = vrot.lane.b32.xlu0 %v1669, 125
          %v1673 = vpop.permute.xlu0 %1672
          %1674 = vrot.lane.b32.xlu0 %v1671, 125
          %v1675 = vpop.permute.xlu0 %1674
          %v1678 = vadd.f32 %v1657, %v1673
          %v1679 = vadd.f32 %v1658, %v1675
          %s1680 = sld [smem:[#allocation9 + $0x42]]
          %v1681 = vstv %s1680
          %v1682 = vmul.f32 %v1681, %v1254
          %v1683 = vmul.f32 %v1681, %v1255
          %v1684 = vmul.f32 %v1681, %v1256
          %v1688 = vrot.slane %v1682, 2
          %v1689 = vrot.slane %v1683, 2
          %v1690 = vsel %vm332, %v1688, %v1689
          %v1691 = vrot.slane %v1684, 2
          %v1692 = vsel %vm332, %v1689, %v1691
          %1693 = vrot.lane.b32.xlu0 %v1690, 125
          %v1694 = vpop.permute.xlu0 %1693
          %1695 = vrot.lane.b32.xlu0 %v1692, 125
          %v1696 = vpop.permute.xlu0 %1695
          %v1699 = vadd.f32 %v1678, %v1694
          %v1700 = vadd.f32 %v1679, %v1696
          %s1701 = sld [smem:[#allocation9 + $0x49]]
          %v1702 = vstv %s1701
          %v1703 = vmul.f32 %v1702, %v1254
          %v1704 = vmul.f32 %v1702, %v1255
          %v1705 = vmul.f32 %v1702, %v1256
          %v1709 = vrot.slane %v1703, 3
          %v1710 = vrot.slane %v1704, 3
          %v1711 = vsel %vm350, %v1709, %v1710
          %v1712 = vrot.slane %v1705, 3
          %v1713 = vsel %vm350, %v1710, %v1712
          %1714 = vrot.lane.b32.xlu0 %v1711, 125
          %v1715 = vpop.permute.xlu0 %1714
          %1716 = vrot.lane.b32.xlu0 %v1713, 125
          %v1717 = vpop.permute.xlu0 %1716
          %v1720 = vadd.f32 %v1699, %v1715
          %v1721 = vadd.f32 %v1700, %v1717
          %s1722 = sld [smem:[#allocation9 + $0x50]]
          %v1723 = vstv %s1722
          %v1724 = vmul.f32 %v1723, %v1254
          %v1725 = vmul.f32 %v1723, %v1255
          %v1726 = vmul.f32 %v1723, %v1256
          %v1730 = vrot.slane %v1724, 4
          %v1731 = vrot.slane %v1725, 4
          %v1732 = vsel %vm368, %v1730, %v1731
          %v1733 = vrot.slane %v1726, 4
          %v1734 = vsel %vm368, %v1731, %v1733
          %1735 = vrot.lane.b32.xlu0 %v1732, 125
          %v1736 = vpop.permute.xlu0 %1735
          %1737 = vrot.lane.b32.xlu0 %v1734, 125
          %v1738 = vpop.permute.xlu0 %1737
          %v1741 = vadd.f32 %v1720, %v1736
          %v1742 = vadd.f32 %v1721, %v1738
          %s1743 = sld [smem:[#allocation9 + $0x57]]
          %v1744 = vstv %s1743
          %v1745 = vmul.f32 %v1744, %v1254
          %v1746 = vmul.f32 %v1744, %v1255
          %v1747 = vmul.f32 %v1744, %v1256
          %v1751 = vrot.slane %v1745, 5
          %v1752 = vrot.slane %v1746, 5
          %v1753 = vsel %vm386, %v1751, %v1752
          %v1754 = vrot.slane %v1747, 5
          %v1755 = vsel %vm386, %v1752, %v1754
          %1756 = vrot.lane.b32.xlu0 %v1753, 125
          %v1757 = vpop.permute.xlu0 %1756
          %1758 = vrot.lane.b32.xlu0 %v1755, 125
          %v1759 = vpop.permute.xlu0 %1758
          %v1762 = vadd.f32 %v1741, %v1757
          %v1763 = vadd.f32 %v1742, %v1759
          %s1764 = sld [smem:[#allocation9 + $0x5e]]
          %v1765 = vstv %s1764
          %v1766 = vmul.f32 %v1765, %v1254
          %v1767 = vmul.f32 %v1765, %v1255
          %v1768 = vmul.f32 %v1765, %v1256
          %v1772 = vrot.slane %v1766, 6
          %v1773 = vrot.slane %v1767, 6
          %v1774 = vsel %vm404, %v1772, %v1773
          %v1775 = vrot.slane %v1768, 6
          %v1776 = vsel %vm404, %v1773, %v1775
          %1777 = vrot.lane.b32.xlu0 %v1774, 125
          %v1778 = vpop.permute.xlu0 %1777
          %1779 = vrot.lane.b32.xlu0 %v1776, 125
          %v1780 = vpop.permute.xlu0 %1779
          %v1783 = vadd.f32 %v1762, %v1778
          %v1784 = vadd.f32 %v1763, %v1780
          %s1785 = sld [smem:[#allocation9 + $0x35]]
          %v1786 = vstv %s1785
          %v1787 = vmul.f32 %v1786, %v1254
          %v1788 = vmul.f32 %v1786, %v1255
          %1791 = vrot.lane.b32.xlu0 %v1787, 124
          %v1792 = vpop.permute.xlu0 %1791
          %1793 = vrot.lane.b32.xlu0 %v1788, 124
          %v1794 = vpop.permute.xlu0 %1793
          %v1797 = vadd.f32 %v1783, %v1792
          %v1798 = vadd.f32 %v1784, %v1794
          %s1799 = sld [smem:[#allocation9 + $0x3c]]
          %v1800 = vstv %s1799
          %v1801 = vmul.f32 %v1800, %v1254
          %v1802 = vmul.f32 %v1800, %v1255
          %v1803 = vmul.f32 %v1800, %v1256
          %v1807 = vrot.slane %v1801, 1
          %v1808 = vrot.slane %v1802, 1
          %v1809 = vsel %vm314, %v1807, %v1808
          %v1810 = vrot.slane %v1803, 1
          %v1811 = vsel %vm314, %v1808, %v1810
          %1812 = vrot.lane.b32.xlu0 %v1809, 124
          %v1813 = vpop.permute.xlu0 %1812
          %1814 = vrot.lane.b32.xlu0 %v1811, 124
          %v1815 = vpop.permute.xlu0 %1814
          %v1818 = vadd.f32 %v1797, %v1813
          %v1819 = vadd.f32 %v1798, %v1815
          %s1820 = sld [smem:[#allocation9 + $0x43]]
          %v1821 = vstv %s1820
          %v1822 = vmul.f32 %v1821, %v1254
          %v1823 = vmul.f32 %v1821, %v1255
          %v1824 = vmul.f32 %v1821, %v1256
          %v1828 = vrot.slane %v1822, 2
          %v1829 = vrot.slane %v1823, 2
          %v1830 = vsel %vm332, %v1828, %v1829
          %v1831 = vrot.slane %v1824, 2
          %v1832 = vsel %vm332, %v1829, %v1831
          %1833 = vrot.lane.b32.xlu0 %v1830, 124
          %v1834 = vpop.permute.xlu0 %1833
          %1835 = vrot.lane.b32.xlu0 %v1832, 124
          %v1836 = vpop.permute.xlu0 %1835
          %v1839 = vadd.f32 %v1818, %v1834
          %v1840 = vadd.f32 %v1819, %v1836
          %s1841 = sld [smem:[#allocation9 + $0x4a]]
          %v1842 = vstv %s1841
          %v1843 = vmul.f32 %v1842, %v1254
          %v1844 = vmul.f32 %v1842, %v1255
          %v1845 = vmul.f32 %v1842, %v1256
          %v1849 = vrot.slane %v1843, 3
          %v1850 = vrot.slane %v1844, 3
          %v1851 = vsel %vm350, %v1849, %v1850
          %v1852 = vrot.slane %v1845, 3
          %v1853 = vsel %vm350, %v1850, %v1852
          %1854 = vrot.lane.b32.xlu0 %v1851, 124
          %v1855 = vpop.permute.xlu0 %1854
          %1856 = vrot.lane.b32.xlu0 %v1853, 124
          %v1857 = vpop.permute.xlu0 %1856
          %v1860 = vadd.f32 %v1839, %v1855
          %v1861 = vadd.f32 %v1840, %v1857
          %s1862 = sld [smem:[#allocation9 + $0x51]]
          %v1863 = vstv %s1862
          %v1864 = vmul.f32 %v1863, %v1254
          %v1865 = vmul.f32 %v1863, %v1255
          %v1866 = vmul.f32 %v1863, %v1256
          %v1870 = vrot.slane %v1864, 4
          %v1871 = vrot.slane %v1865, 4
          %v1872 = vsel %vm368, %v1870, %v1871
          %v1873 = vrot.slane %v1866, 4
          %v1874 = vsel %vm368, %v1871, %v1873
          %1875 = vrot.lane.b32.xlu0 %v1872, 124
          %v1876 = vpop.permute.xlu0 %1875
          %1877 = vrot.lane.b32.xlu0 %v1874, 124
          %v1878 = vpop.permute.xlu0 %1877
          %v1881 = vadd.f32 %v1860, %v1876
          %v1882 = vadd.f32 %v1861, %v1878
          %s1883 = sld [smem:[#allocation9 + $0x58]]
          %v1884 = vstv %s1883
          %v1885 = vmul.f32 %v1884, %v1254
          %v1886 = vmul.f32 %v1884, %v1255
          %v1887 = vmul.f32 %v1884, %v1256
          %v1891 = vrot.slane %v1885, 5
          %v1892 = vrot.slane %v1886, 5
          %v1893 = vsel %vm386, %v1891, %v1892
          %v1894 = vrot.slane %v1887, 5
          %v1895 = vsel %vm386, %v1892, %v1894
          %1896 = vrot.lane.b32.xlu0 %v1893, 124
          %v1897 = vpop.permute.xlu0 %1896
          %1898 = vrot.lane.b32.xlu0 %v1895, 124
          %v1899 = vpop.permute.xlu0 %1898
          %v1902 = vadd.f32 %v1881, %v1897
          %v1903 = vadd.f32 %v1882, %v1899
          %s1904 = sld [smem:[#allocation9 + $0x5f]]
          %v1905 = vstv %s1904
          %v1906 = vmul.f32 %v1905, %v1254
          %v1907 = vmul.f32 %v1905, %v1255
          %v1908 = vmul.f32 %v1905, %v1256
          %v1912 = vrot.slane %v1906, 6
          %v1913 = vrot.slane %v1907, 6
          %v1914 = vsel %vm404, %v1912, %v1913
          %v1915 = vrot.slane %v1908, 6
          %v1916 = vsel %vm404, %v1913, %v1915
          %1917 = vrot.lane.b32.xlu0 %v1914, 124
          %v1918 = vpop.permute.xlu0 %1917
          %1919 = vrot.lane.b32.xlu0 %v1916, 124
          %v1920 = vpop.permute.xlu0 %1919
          %v1923 = vadd.f32 %v1902, %v1918
          %v1924 = vadd.f32 %v1903, %v1920
          %s1925 = sld [smem:[#allocation9 + $0x36]]
          %v1926 = vstv %s1925
          %v1927 = vmul.f32 %v1926, %v1254
          %v1928 = vmul.f32 %v1926, %v1255
          %1931 = vrot.lane.b32.xlu0 %v1927, 123
          %v1932 = vpop.permute.xlu0 %1931
          %1933 = vrot.lane.b32.xlu0 %v1928, 123
          %v1934 = vpop.permute.xlu0 %1933
          %v1937 = vadd.f32 %v1923, %v1932
          %v1938 = vadd.f32 %v1924, %v1934
          %s1939 = sld [smem:[#allocation9 + $0x3d]]
          %v1940 = vstv %s1939
          %v1941 = vmul.f32 %v1940, %v1254
          %v1942 = vmul.f32 %v1940, %v1255
          %v1943 = vmul.f32 %v1940, %v1256
          %v1947 = vrot.slane %v1941, 1
          %v1948 = vrot.slane %v1942, 1
          %v1949 = vsel %vm314, %v1947, %v1948
          %v1950 = vrot.slane %v1943, 1
          %v1951 = vsel %vm314, %v1948, %v1950
          %1952 = vrot.lane.b32.xlu0 %v1949, 123
          %v1953 = vpop.permute.xlu0 %1952
          %1954 = vrot.lane.b32.xlu0 %v1951, 123
          %v1955 = vpop.permute.xlu0 %1954
          %v1958 = vadd.f32 %v1937, %v1953
          %v1959 = vadd.f32 %v1938, %v1955
          %s1960 = sld [smem:[#allocation9 + $0x44]]
          %v1961 = vstv %s1960
          %v1962 = vmul.f32 %v1961, %v1254
          %v1963 = vmul.f32 %v1961, %v1255
          %v1964 = vmul.f32 %v1961, %v1256
          %v1968 = vrot.slane %v1962, 2
          %v1969 = vrot.slane %v1963, 2
          %v1970 = vsel %vm332, %v1968, %v1969
          %v1971 = vrot.slane %v1964, 2
          %v1972 = vsel %vm332, %v1969, %v1971
          %1973 = vrot.lane.b32.xlu0 %v1970, 123
          %v1974 = vpop.permute.xlu0 %1973
          %1975 = vrot.lane.b32.xlu0 %v1972, 123
          %v1976 = vpop.permute.xlu0 %1975
          %v1979 = vadd.f32 %v1958, %v1974
          %v1980 = vadd.f32 %v1959, %v1976
          %s1981 = sld [smem:[#allocation9 + $0x4b]]
          %v1982 = vstv %s1981
          %v1983 = vmul.f32 %v1982, %v1254
          %v1984 = vmul.f32 %v1982, %v1255
          %v1985 = vmul.f32 %v1982, %v1256
          %v1989 = vrot.slane %v1983, 3
          %v1990 = vrot.slane %v1984, 3
          %v1991 = vsel %vm350, %v1989, %v1990
          %v1992 = vrot.slane %v1985, 3
          %v1993 = vsel %vm350, %v1990, %v1992
          %1994 = vrot.lane.b32.xlu0 %v1991, 123
          %v1995 = vpop.permute.xlu0 %1994
          %1996 = vrot.lane.b32.xlu0 %v1993, 123
          %v1997 = vpop.permute.xlu0 %1996
          %v2000 = vadd.f32 %v1979, %v1995
          %v2001 = vadd.f32 %v1980, %v1997
          %s2002 = sld [smem:[#allocation9 + $0x52]]
          %v2003 = vstv %s2002
          %v2004 = vmul.f32 %v2003, %v1254
          %v2005 = vmul.f32 %v2003, %v1255
          %v2006 = vmul.f32 %v2003, %v1256
          %v2010 = vrot.slane %v2004, 4
          %v2011 = vrot.slane %v2005, 4
          %v2012 = vsel %vm368, %v2010, %v2011
          %v2013 = vrot.slane %v2006, 4
          %v2014 = vsel %vm368, %v2011, %v2013
          %2015 = vrot.lane.b32.xlu0 %v2012, 123
          %v2016 = vpop.permute.xlu0 %2015
          %2017 = vrot.lane.b32.xlu0 %v2014, 123
          %v2018 = vpop.permute.xlu0 %2017
          %v2021 = vadd.f32 %v2000, %v2016
          %v2022 = vadd.f32 %v2001, %v2018
          %s2023 = sld [smem:[#allocation9 + $0x59]]
          %v2024 = vstv %s2023
          %v2025 = vmul.f32 %v2024, %v1254
          %v2026 = vmul.f32 %v2024, %v1255
          %v2027 = vmul.f32 %v2024, %v1256
          %v2031 = vrot.slane %v2025, 5
          %v2032 = vrot.slane %v2026, 5
          %v2033 = vsel %vm386, %v2031, %v2032
          %v2034 = vrot.slane %v2027, 5
          %v2035 = vsel %vm386, %v2032, %v2034
          %2036 = vrot.lane.b32.xlu0 %v2033, 123
          %v2037 = vpop.permute.xlu0 %2036
          %2038 = vrot.lane.b32.xlu0 %v2035, 123
          %v2039 = vpop.permute.xlu0 %2038
          %v2042 = vadd.f32 %v2021, %v2037
          %v2043 = vadd.f32 %v2022, %v2039
          %s2044 = sld [smem:[#allocation9 + $0x60]]
          %v2045 = vstv %s2044
          %v2046 = vmul.f32 %v2045, %v1254
          %v2047 = vmul.f32 %v2045, %v1255
          %v2048 = vmul.f32 %v2045, %v1256
          %v2052 = vrot.slane %v2046, 6
          %v2053 = vrot.slane %v2047, 6
          %v2054 = vsel %vm404, %v2052, %v2053
          %v2055 = vrot.slane %v2048, 6
          %v2056 = vsel %vm404, %v2053, %v2055
          %2057 = vrot.lane.b32.xlu0 %v2054, 123
          %v2058 = vpop.permute.xlu0 %2057
          %2059 = vrot.lane.b32.xlu0 %v2056, 123
          %v2060 = vpop.permute.xlu0 %2059
          %v2063 = vadd.f32 %v2042, %v2058
          %v2064 = vadd.f32 %v2043, %v2060
          %s2065 = sld [smem:[#allocation9 + $0x37]]
          %v2066 = vstv %s2065
          %v2067 = vmul.f32 %v2066, %v1254
          %v2068 = vmul.f32 %v2066, %v1255
          %2071 = vrot.lane.b32.xlu0 %v2067, 122
          %v2072 = vpop.permute.xlu0 %2071
          %2073 = vrot.lane.b32.xlu0 %v2068, 122
          %v2074 = vpop.permute.xlu0 %2073
          %v2077 = vadd.f32 %v2063, %v2072
          %v2078 = vadd.f32 %v2064, %v2074
          %s2079 = sld [smem:[#allocation9 + $0x3e]]
          %v2080 = vstv %s2079
          %v2081 = vmul.f32 %v2080, %v1254
          %v2082 = vmul.f32 %v2080, %v1255
          %v2083 = vmul.f32 %v2080, %v1256
          %v2087 = vrot.slane %v2081, 1
          %v2088 = vrot.slane %v2082, 1
          %v2089 = vsel %vm314, %v2087, %v2088
          %v2090 = vrot.slane %v2083, 1
          %v2091 = vsel %vm314, %v2088, %v2090
          %2092 = vrot.lane.b32.xlu0 %v2089, 122
          %v2093 = vpop.permute.xlu0 %2092
          %2094 = vrot.lane.b32.xlu0 %v2091, 122
          %v2095 = vpop.permute.xlu0 %2094
          %v2098 = vadd.f32 %v2077, %v2093
          %v2099 = vadd.f32 %v2078, %v2095
          %s2100 = sld [smem:[#allocation9 + $0x45]]
          %v2101 = vstv %s2100
          %v2102 = vmul.f32 %v2101, %v1254
          %v2103 = vmul.f32 %v2101, %v1255
          %v2104 = vmul.f32 %v2101, %v1256
          %v2108 = vrot.slane %v2102, 2
          %v2109 = vrot.slane %v2103, 2
          %v2110 = vsel %vm332, %v2108, %v2109
          %v2111 = vrot.slane %v2104, 2
          %v2112 = vsel %vm332, %v2109, %v2111
          %2113 = vrot.lane.b32.xlu0 %v2110, 122
          %v2114 = vpop.permute.xlu0 %2113
          %2115 = vrot.lane.b32.xlu0 %v2112, 122
          %v2116 = vpop.permute.xlu0 %2115
          %v2119 = vadd.f32 %v2098, %v2114
          %v2120 = vadd.f32 %v2099, %v2116
          %s2121 = sld [smem:[#allocation9 + $0x4c]]
          %v2122 = vstv %s2121
          %v2123 = vmul.f32 %v2122, %v1254
          %v2124 = vmul.f32 %v2122, %v1255
          %v2125 = vmul.f32 %v2122, %v1256
          %v2129 = vrot.slane %v2123, 3
          %v2130 = vrot.slane %v2124, 3
          %v2131 = vsel %vm350, %v2129, %v2130
          %v2132 = vrot.slane %v2125, 3
          %v2133 = vsel %vm350, %v2130, %v2132
          %2134 = vrot.lane.b32.xlu0 %v2131, 122
          %v2135 = vpop.permute.xlu0 %2134
          %2136 = vrot.lane.b32.xlu0 %v2133, 122
          %v2137 = vpop.permute.xlu0 %2136
          %v2140 = vadd.f32 %v2119, %v2135
          %v2141 = vadd.f32 %v2120, %v2137
          %s2142 = sld [smem:[#allocation9 + $0x53]]
          %v2143 = vstv %s2142
          %v2144 = vmul.f32 %v2143, %v1254
          %v2145 = vmul.f32 %v2143, %v1255
          %v2146 = vmul.f32 %v2143, %v1256
          %v2150 = vrot.slane %v2144, 4
          %v2151 = vrot.slane %v2145, 4
          %v2152 = vsel %vm368, %v2150, %v2151
          %v2153 = vrot.slane %v2146, 4
          %v2154 = vsel %vm368, %v2151, %v2153
          %2155 = vrot.lane.b32.xlu0 %v2152, 122
          %v2156 = vpop.permute.xlu0 %2155
          %2157 = vrot.lane.b32.xlu0 %v2154, 122
          %v2158 = vpop.permute.xlu0 %2157
          %v2161 = vadd.f32 %v2140, %v2156
          %v2162 = vadd.f32 %v2141, %v2158
          %s2163 = sld [smem:[#allocation9 + $0x5a]]
          %v2164 = vstv %s2163
          %v2165 = vmul.f32 %v2164, %v1254
          %v2166 = vmul.f32 %v2164, %v1255
          %v2167 = vmul.f32 %v2164, %v1256
          %v2171 = vrot.slane %v2165, 5
          %v2172 = vrot.slane %v2166, 5
          %v2173 = vsel %vm386, %v2171, %v2172
          %v2174 = vrot.slane %v2167, 5
          %v2175 = vsel %vm386, %v2172, %v2174
          %2176 = vrot.lane.b32.xlu0 %v2173, 122
          %v2177 = vpop.permute.xlu0 %2176
          %2178 = vrot.lane.b32.xlu0 %v2175, 122
          %v2179 = vpop.permute.xlu0 %2178
          %v2182 = vadd.f32 %v2161, %v2177
          %v2183 = vadd.f32 %v2162, %v2179
          %s2184 = sld [smem:[#allocation9 + $0x61]]
          %v2185 = vstv %s2184
          %v2186 = vmul.f32 %v2185, %v1254
          %v2187 = vmul.f32 %v2185, %v1255
          %v2188 = vmul.f32 %v2185, %v1256
          %v2192 = vrot.slane %v2186, 6
          %v2193 = vrot.slane %v2187, 6
          %v2194 = vsel %vm404, %v2192, %v2193
          %v2195 = vrot.slane %v2188, 6
          %v2196 = vsel %vm404, %v2193, %v2195
          %2197 = vrot.lane.b32.xlu0 %v2194, 122
          %v2198 = vpop.permute.xlu0 %2197
          %2199 = vrot.lane.b32.xlu0 %v2196, 122
          %v2200 = vpop.permute.xlu0 %2199
          %v2203 = vadd.f32 %v2182, %v2198
          %v2204 = vadd.f32 %v2183, %v2200
          %v2205 = vxor.u32 %v2203, 2147483648
          %v2206 = vxor.u32 %v2204, 2147483648
          %v2207 = vmul.f32 %v2205, 1.442695
          %v2208 = vpow.pop %v2207
          %v2209 = vmul.f32 %v2206, 1.442695
          %v2210 = vpow.pop %v2209
          %v2211 = vadd.f32 %v2208, 1.0
          %v2212 = vadd.f32 %v2210, 1.0
          %v2213 = vrcp.pop %v2211
          %v2214 = vmul.f32 1.0, %v2213
          %v2215 = vrcp.pop %v2212
          %v2216 = vmul.f32 1.0, %v2215
          %2217 = vst.msk [vmem:[%s192] sm:$0xff] %vm202, %v2214
          %2218 = vst.msk [vmem:[%s192 + $0x8] sm:$0xff] %vm202, %v2216
        $region44: #{tpu_custom_call.1} parent=27 // pred_fallthru
          _
        %s2219 = sand.u32 %s89, 1
        %s2220 = scalar_lea.sflag [#allocation7], %s2219
        %s2221 = sand.u32 %s89, 1
        %s2222 = smul.addr %s2221, 16
        %s2223 = scalar_lea.vmem [#allocation10], %s2222
        // Predicated region
        $region45: #{tpu_custom_call.1} parent=27 // pred_check
          %p2224 = pneg %p99
        $region46: #{tpu_custom_call.1} parent=27 // pred_check_branch
          %2226 = sbr.rel (%p2224) target = $region48
        $region47: #{tpu_custom_call.1} parent=27 // pred_region
          %s2228 = ssub.s32 256, 256
          %2229 = vsyncadd %s2220, %s2228
          %s2230 = smul.addr %s24, 2
          %s2231 = smul.addr %s2230, 128
          %s2232 = scalar_lea.hbm %s2, %s2231
          %s2233 = sshll.u32 %s2223, 4
          %s2234 = int_to_ptr.vmem [resolvable:$true] %s2233
          %2239 = dma.vmem_to_hbm [thread:$0]  %s2234, 256, %s2232, %s2220, 128, 128, 8
        $region48: #{tpu_custom_call.1} parent=27 // pred_fallthru
          _
      $region28: #{tpu_custom_call.1} parent=5 // pred_fallthru
        _
      %p2240 = scmp.le.s32.totalorder 2, %s15
      // Predicated region
      $region49: #{tpu_custom_call.1} parent=5 // pred_check
        %p2241 = pneg %p2240
      $region50: #{tpu_custom_call.1} parent=5 // pred_check_branch
        %2243 = sbr.rel (%p2241) target = $region52
      $region51: #{tpu_custom_call.1} parent=5 // pred_region
        %s2244 = ssub.s32 %s15, 2
        // Predicated region
        $region53: #{tpu_custom_call.1} parent=51 // pred_check
          %p2245 = pneg %p105
        $region54: #{tpu_custom_call.1} parent=51 // pred_check_branch
          %2247 = sbr.rel (%p2245) target = $region56
        $region55: #{tpu_custom_call.1} parent=51 // pred_region
          %s2248 = sand.u32 %s90, 1
          %s2249 = scalar_lea.sflag [#allocation7], %s2248
          %s2250 = sand.u32 %s90, 1
          %s2251 = smul.addr %s2250, 16
          %s2252 = scalar_lea.vmem [#allocation10], %s2251
          %2253 = dma.done %s2249, 256
        $region56: #{tpu_custom_call.1} parent=51 // pred_fallthru
          _
      $region52: #{tpu_custom_call.1} parent=5 // pred_fallthru
        _
    $region6: #{tpu_custom_call.1} parent=1 // loop_footer
      %s19 = sadd.s32 1, %s15
    $region7: #{tpu_custom_call.1} parent=1 // loop_footer_branch
      %14 = sbr.rel target = $region3
    $region8: #{tpu_custom_call.1} parent=1 // loop_exit
      _
    %2254 = vsyncpa [#allocation6], 1
    %s2255 = scalar_lea.sflag [#allocation6], 1
    %2256 = vsyncpa %s2255, 1
    %2257 = vsyncpa [#allocation7], 1
    %s2258 = scalar_lea.sflag [#allocation7], 1
    %2259 = vsyncpa %s2258, 1
    %2260 = vsyncpa [#allocation8], 1
    %s2261 = scalar_lea.sflag [#allocation8], 1
    %2262 = vsyncpa %s2261, 1

</llo_original>
